<compile_context>
chip_gen: v5e
topology: v5e:2x2
jax: 0.10.0
libtpu: 0.0.40
codegen_flags: <defaults>
</compile_context>

<pallas_src>
import functools

import jax
import jax.numpy as jnp
from jax.experimental import pallas as pl
from jax.experimental.pallas import tpu as pltpu

LANE = 128
SUBLANE = 8
ROW_CAP = 512   # rows (frames) per grid block; fits v7x scoped VMEM, keeps grid >= 2


def _round_up(n, m):
    return (n + m - 1) // m * m


def _gelu(x):
    # tanh-approximate GELU (EUP-friendly). PyTorch's default is exact erf;
    # use approximate=False if bit parity with a torch reference is required.
    return jax.nn.gelu(x, approximate=True)


def _pad_last(a, target):
    pad = target - a.shape[-1]
    if pad == 0:
        return a
    return jnp.pad(a, [(0, 0)] * (a.ndim - 1) + [(0, pad)])


# --------------------------------------------------------------------------- #
# Kernel: fully fused per-batch-block forward                                  #
# --------------------------------------------------------------------------- #
def mae_kernel(x_ref, maskb_ref, pos_ref,
               w1_ref, b1_ref, w2_ref, b2_ref,
               lng_ref, lnb_ref, mtok_ref,
               wd1_ref, bd1_ref, wd2_ref, bd2_ref,
               out_ref, *, frames_padded, frames_valid, hidden):
    Tp = frames_padded
    R = out_ref.shape[0]          # rows in this block = samples_per_block * Tp
    bb = R // Tp
    Hp = pos_ref.shape[-1]
    bf16 = jnp.bfloat16
    f32 = jnp.float32

    # Per-row time index within its sample (blocks contain whole samples).
    row = jax.lax.broadcasted_iota(jnp.int32, (R, 1), 0)
    tpos = row % Tp
    first = tpos == 0
    last = tpos == frames_valid - 1   # real last frame (padded frames are junk rows)

    def halo_cat(center_f32, center_bf16):
        # k=3 "same" conv taps built with sublane rolls (XLU slot) + edge masks,
        # then lane-concatenated for a single im2col matmul.  Rolls stay in f32
        # for robust lowering; pieces are cast to bf16 so the (R, 3K) temp is
        # half-width and the MXU operands are bf16.
        prev = jnp.where(first, 0.0, pltpu.roll(center_f32, 1, axis=0))
        nxt = jnp.where(last, 0.0, pltpu.roll(center_f32, R - 1, axis=0))
        return jnp.concatenate(
            [prev.astype(bf16), center_bf16, nxt.astype(bf16)], axis=-1)

    # ---------------- encoder: conv1 (k=3) as one im2col matmul --------------
    x_bf = x_ref[...]                                         # (R, Mp) bf16
    xcat = halo_cat(x_bf.astype(f32), x_bf)                   # (R, 3*Mp) bf16
    acc1 = jnp.dot(xcat, w1_ref[...],
                   preferred_element_type=f32) + b1_ref[...]
    y1 = _gelu(acc1)                                          # (R, Hp) f32

    # ---------------- conv2 (k=3), same trick — no VMEM scratch --------------
    ycat = halo_cat(y1, y1.astype(bf16))                      # (R, 3*Hp) bf16
    acc2 = jnp.dot(ycat, w2_ref[...],
                   preferred_element_type=f32) + b2_ref[...]
    y2 = _gelu(acc2)                                          # (R, Hp) f32

    # ---------------- positional embedding + LayerNorm over real H lanes -----
    # pos is (Tp, Hp); broadcast over the bb samples in this block.
    h = (y2.reshape(bb, Tp, Hp) + pos_ref[...]).reshape(R, Hp)
    inv_h = 1.0 / hidden
    mu = jnp.sum(h, axis=-1, keepdims=True) * inv_h
    ex2 = jnp.sum(h * h, axis=-1, keepdims=True) * inv_h
    var = ex2 - mu * mu
    enc = (h - mu) * jax.lax.rsqrt(var + 1e-5) * lng_ref[...] + lnb_ref[...]

    # ---------------- decoder: mask-token insertion + MLP --------------------
    m = maskb_ref[...][:, 0:1]                                # (R, 1) {0,1}
    d_in = enc + m * mtok_ref[...]                            # VPU broadcast
    d1 = _gelu(jnp.dot(d_in.astype(bf16), wd1_ref[...],
                       preferred_element_type=f32) + bd1_ref[...])
    pred = jnp.dot(d1.astype(bf16), wd2_ref[...],
                   preferred_element_type=f32) + bd2_ref[...]
    out_ref[...] = pred.astype(out_ref.dtype)                 # (R, Mp) lane-dense


# --------------------------------------------------------------------------- #
# Parameters                                                                   #
# --------------------------------------------------------------------------- #
def init_params(key, n_mels, n_frames, hidden):
    ks = jax.random.split(key, 6)
    s = 0.05
    f32 = jnp.float32
    return dict(
        w1=jax.random.normal(ks[0], (3, n_mels, hidden), f32) * s,
        b1=jnp.zeros((hidden,), f32),
        w2=jax.random.normal(ks[1], (3, hidden, hidden), f32) * s,
        b2=jnp.zeros((hidden,), f32),
        pos=jax.random.normal(ks[2], (n_frames, hidden), f32) * s,
        ln_g=jnp.ones((hidden,), f32),
        ln_b=jnp.zeros((hidden,), f32),
        mtok=jax.random.normal(ks[3], (hidden,), f32) * s,
        wd1=jax.random.normal(ks[4], (hidden, hidden), f32) * s,
        bd1=jnp.zeros((hidden,), f32),
        wd2=jax.random.normal(ks[5], (hidden, n_mels), f32) * s,
        bd2=jnp.zeros((n_mels,), f32),
    )


def pack_params(params):
    """One-time packing: lane-pad to multiples of 128, sublane-pad frames to 8,
    fold conv taps (im2col), cast matmul weights to bf16 (f32 accumulate in
    kernel).  Call ONCE at load time — not inside the jitted forward.

    Invariant relied on by the in-kernel LayerNorm: all pad lanes of w2's
    output columns, b2, pos and ln_g are exactly zero (so padded hidden lanes
    stay zero and don't perturb the mean/var over the real `hidden` lanes)."""
    n_mels, hidden = params["w1"].shape[1], params["w1"].shape[2]
    n_frames = params["pos"].shape[0]
    Mp = _round_up(n_mels, LANE)
    Hp = _round_up(hidden, LANE)
    Tp = _round_up(n_frames, SUBLANE)
    bf16 = jnp.bfloat16

    def fold_conv(w, kin, kinp):
        # (3, kin, hidden) -> zero-pad -> (3*kinp, Hp), tap k at rows k*kinp.
        w = jnp.pad(w, ((0, 0), (0, kinp - kin), (0, Hp - hidden)))
        return w.reshape(3 * kinp, Hp).astype(bf16)

    def rowvec(v, width):
        return _pad_last(v[None, :], width)

    return dict(
        w1=fold_conv(params["w1"], n_mels, Mp),
        b1=rowvec(params["b1"], Hp),
        w2=fold_conv(params["w2"], hidden, Hp),
        b2=rowvec(params["b2"], Hp),
        pos=jnp.pad(params["pos"], ((0, Tp - n_frames), (0, Hp - hidden))),
        ln_g=rowvec(params["ln_g"], Hp),
        ln_b=rowvec(params["ln_b"], Hp),
        mtok=rowvec(params["mtok"], Hp),
        wd1=jnp.pad(params["wd1"],
                    ((0, Hp - hidden), (0, Hp - hidden))).astype(bf16),
        bd1=rowvec(params["bd1"], Hp),
        wd2=jnp.pad(params["wd2"],
                    ((0, Hp - hidden), (0, Mp - n_mels))).astype(bf16),
        bd2=rowvec(params["bd2"], Mp),
    )


def _vmem_estimate_bytes(R, Mp, Hp, Tp):
    """Rough per-block VMEM need (activations + weights)."""
    b2, f4 = 2, 4
    act = 2 * R * Mp * b2                # x, double-buffered (bf16)
    act += 2 * R * LANE * f4             # slim mask tile
    act += 2 * R * Mp * f4               # output
    act += R * 3 * Mp * (b2 + f4)        # conv1 halo temps
    act += R * 3 * Hp * (b2 + f4)        # conv2 halo temps
    act += 8 * R * Hp * f4               # f32 activations (gelu/LN/decoder)
    wts = (3 * Mp + 3 * Hp + Hp) * Hp * b2 + Hp * Mp * b2
    wts += Tp * Hp * f4 + 8 * Hp * f4 + 2 * Mp * f4
    return act + wts


# --------------------------------------------------------------------------- #
# Wrapper                                                                      #
# --------------------------------------------------------------------------- #
@functools.partial(jax.jit, static_argnames=("hidden",))
def mae_forward(masked_features, mask, packed, *, hidden):
    """masked_features: (B, N_MELS, N_FRAMES)  mask: (B, N_FRAMES) bool
       packed: output of pack_params() (done once at load time)
       returns predictions: (B, N_FRAMES, N_MELS)"""
    B, M, T = masked_features.shape
    Mp = _round_up(M, LANE)
    Hp = packed["wd1"].shape[0]
    Tp = _round_up(T, SUBLANE)
    assert packed["pos"].shape[0] == Tp, "params/frame-count mismatch"

    # --- block / grid sizing -------------------------------------------------
    # Whole (padded) samples per block, capped at ~ROW_CAP rows (v7x VMEM safe),
    # at least 2 grid steps when B > 1 (megacore sharding + DMA pipelining),
    # no divisibility requirement on B (batch is cdiv-padded below).
    bb = max(1, ROW_CAP // Tp)
    if B > 1:
        bb = min(bb, (B + 1) // 2)
    bb = min(bb, B)
    Bp = _round_up(B, bb)
    R = bb * Tp
    grid = (Bp // bb,)

    # --- glue: time-major bf16 layout, lane/sublane/batch padding -------------
    x = jnp.transpose(masked_features, (0, 2, 1)).astype(jnp.bfloat16)  # cast fused
    x = jnp.pad(x, ((0, Bp - B), (0, Tp - T), (0, Mp - M))).reshape(Bp * Tp, Mp)

    maskf = jnp.pad(mask.astype(jnp.float32), ((0, Bp - B), (0, Tp - T)))
    maskb = jnp.broadcast_to(maskf.reshape(Bp * Tp, 1), (Bp * Tp, LANE))  # slim tile

    vmem_limit = int(min(60 * 2 ** 20,
                         max(32 * 2 ** 20,
                             int(1.5 * _vmem_estimate_bytes(R, Mp, Hp, Tp)))))

    def full(a):
        n = a.ndim
        return pl.BlockSpec(a.shape, lambda i, _n=n: (0,) * _n)

    row_m = pl.BlockSpec((R, Mp), lambda i: (i, 0))
    row_l = pl.BlockSpec((R, LANE), lambda i: (i, 0))

    in_specs = [
        row_m,                  # x (bf16)
        row_l,                  # mask (slim {0,1} tile)
        full(packed["pos"]),    # positional embedding (Tp, Hp)
        full(packed["w1"]), full(packed["b1"]),
        full(packed["w2"]), full(packed["b2"]),
        full(packed["ln_g"]), full(packed["ln_b"]), full(packed["mtok"]),
        full(packed["wd1"]), full(packed["bd1"]),
        full(packed["wd2"]), full(packed["bd2"]),
    ]

    kernel = functools.partial(mae_kernel,
                               frames_padded=Tp, frames_valid=T, hidden=hidden)

    out = pl.pallas_call(
        kernel,
        out_shape=jax.ShapeDtypeStruct((Bp * Tp, Mp), jnp.float32),
        grid_spec=pltpu.PrefetchScalarGridSpec(
            num_scalar_prefetch=0,
            grid=grid,
            in_specs=in_specs,
            out_specs=pl.BlockSpec((R, Mp), lambda i: (i, 0)),
        ),
        compiler_params=pltpu.CompilerParams(
            # batch blocks are independent -> shard across v7x's two TCs
            dimension_semantics=("parallel",),
            vmem_limit_bytes=vmem_limit,
        ),
    )(x, maskb, packed["pos"],
      packed["w1"], packed["b1"], packed["w2"], packed["b2"],
      packed["ln_g"], packed["ln_b"], packed["mtok"],
      packed["wd1"], packed["bd1"], packed["wd2"], packed["bd2"])

    return out.reshape(Bp, Tp, Mp)[:B, :T, :M]


# --------------------------------------------------------------------------- #
# Pure-JAX reference (same math, ground-truth pad-based conv) for a            #
# correctness check of the roll/im2col kernel.                                 #
# --------------------------------------------------------------------------- #
def mae_reference(masked_features, mask, params):
    bf16 = jnp.bfloat16
    f32 = jnp.float32
    x = jnp.transpose(masked_features, (0, 2, 1)).astype(f32)          # (B,T,M)
    T = x.shape[1]

    def conv3(a, w, b):
        ap = jnp.pad(a, ((0, 0), (1, 1), (0, 0)))
        cat = jnp.concatenate([ap[:, k:k + T, :] for k in range(3)], axis=-1)
        wf = w.reshape(-1, w.shape[-1])
        return jnp.dot(cat.astype(bf16), wf.astype(bf16),
                       preferred_element_type=f32) + b

    y1 = _gelu(conv3(x, params["w1"], params["b1"]))
    y2 = _gelu(conv3(y1, params["w2"], params["b2"]))
    h = y2 + params["pos"][None]
    H = h.shape[-1]
    mu = jnp.sum(h, -1, keepdims=True) / H
    var = jnp.sum(h * h, -1, keepdims=True) / H - mu * mu
    enc = (h - mu) * jax.lax.rsqrt(var + 1e-5) * params["ln_g"] + params["ln_b"]
    d_in = enc + mask.astype(f32)[..., None] * params["mtok"]
    d1 = _gelu(jnp.dot(d_in.astype(bf16), params["wd1"].astype(bf16),
                       preferred_element_type=f32) + params["bd1"])
    return jnp.dot(d1.astype(bf16), params["wd2"].astype(bf16),
                   preferred_element_type=f32) + params["bd2"]


if __name__ == "__main__":
    B, N_MELS, N_FRAMES, HIDDEN = 2, 16, 32, 32

    key = jax.random.PRNGKey(0)
    k_feat, k_mask, k_par = jax.random.split(key, 3)

    features = jax.random.normal(k_feat, (B, N_MELS, N_FRAMES), jnp.float32)
    mask = jax.random.bernoulli(k_mask, 0.3, (B, N_FRAMES))   # True = masked
    # zero-masking assumed from the data loader
    masked_features = features * (~mask)[:, None, :].astype(jnp.float32)

    params = init_params(k_par, N_MELS, N_FRAMES, HIDDEN)
    packed = pack_params(params)          # one-time packing, outside the jit

    preds = mae_forward(masked_features, mask, packed, hidden=HIDDEN)
    preds = jax.block_until_ready(preds)

    assert preds.shape[0] == masked_features.shape[0], "Batch size mismatch"
    assert preds.shape[1] == N_FRAMES, "Frame count mismatch in output"
    assert preds.shape[2] == N_MELS, "Mel dimension mismatch"
    assert bool(jnp.all(jnp.isfinite(preds)))

    ref = mae_reference(masked_features, mask, params)
    assert bool(jnp.allclose(preds, ref, atol=1e-2, rtol=1e-2)), (
        "kernel/reference mismatch")

    print("KERNEL_OK")
</pallas_src>

<mosaic_0001>
module attributes {stable_mosaic.version = 11 : i64} {
  func.func @mae_kernel(%arg0: i32, %arg1: memref<32x128xbf16, #tpu.memory_space<vmem>>, %arg2: memref<32x128xf32, #tpu.memory_space<vmem>>, %arg3: memref<32x128xf32, #tpu.memory_space<vmem>>, %arg4: memref<384x128xbf16, #tpu.memory_space<vmem>>, %arg5: memref<1x128xf32, #tpu.memory_space<vmem>>, %arg6: memref<384x128xbf16, #tpu.memory_space<vmem>>, %arg7: memref<1x128xf32, #tpu.memory_space<vmem>>, %arg8: memref<1x128xf32, #tpu.memory_space<vmem>>, %arg9: memref<1x128xf32, #tpu.memory_space<vmem>>, %arg10: memref<1x128xf32, #tpu.memory_space<vmem>>, %arg11: memref<128x128xbf16, #tpu.memory_space<vmem>>, %arg12: memref<1x128xf32, #tpu.memory_space<vmem>>, %arg13: memref<128x128xbf16, #tpu.memory_space<vmem>>, %arg14: memref<1x128xf32, #tpu.memory_space<vmem>>, %arg15: memref<32x128xf32, #tpu.memory_space<vmem>>) attributes {dimension_semantics = [#tpu.dimension_semantics<parallel>], iteration_bounds = array<i64: 2>, scalar_prefetch = 0 : i64, scratch_operands = 0 : i64, tpu.core_type = #tpu.core_type<tc>, window_params = [{transform_indices = @transform_0, window_bounds = array<i64: 32, 128>}, {transform_indices = @transform_1, window_bounds = array<i64: 32, 128>}, {pipeline_mode = #tpu.pipeline_mode<synchronous>, transform_indices = @transform_2, window_bounds = array<i64: 32, 128>}, {pipeline_mode = #tpu.pipeline_mode<synchronous>, transform_indices = @transform_3, window_bounds = array<i64: 384, 128>}, {pipeline_mode = #tpu.pipeline_mode<synchronous>, transform_indices = @transform_4, window_bounds = array<i64: 1, 128>}, {pipeline_mode = #tpu.pipeline_mode<synchronous>, transform_indices = @transform_5, window_bounds = array<i64: 384, 128>}, {pipeline_mode = #tpu.pipeline_mode<synchronous>, transform_indices = @transform_6, window_bounds = array<i64: 1, 128>}, {pipeline_mode = #tpu.pipeline_mode<synchronous>, transform_indices = @transform_7, window_bounds = array<i64: 1, 128>}, {pipeline_mode = #tpu.pipeline_mode<synchronous>, transform_indices = @transform_8, window_bounds = array<i64: 1, 128>}, {pipeline_mode = #tpu.pipeline_mode<synchronous>, transform_indices = @transform_9, window_bounds = array<i64: 1, 128>}, {pipeline_mode = #tpu.pipeline_mode<synchronous>, transform_indices = @transform_10, window_bounds = array<i64: 128, 128>}, {pipeline_mode = #tpu.pipeline_mode<synchronous>, transform_indices = @transform_11, window_bounds = array<i64: 1, 128>}, {pipeline_mode = #tpu.pipeline_mode<synchronous>, transform_indices = @transform_12, window_bounds = array<i64: 128, 128>}, {pipeline_mode = #tpu.pipeline_mode<synchronous>, transform_indices = @transform_13, window_bounds = array<i64: 1, 128>}, {transform_indices = @transform_14, window_bounds = array<i64: 32, 128>}]} {
    %0 = tpu.iota {dimensions = array<i32: 0>} : vector<32x1xi32>
    %c32_i32 = arith.constant 32 : i32
    %c0_i32 = arith.constant 0 : i32
    %1 = arith.cmpi eq, %c32_i32, %c0_i32 : i32
    %c1_i32 = arith.constant 1 : i32
    %2 = arith.select %1, %c1_i32, %c32_i32 : i32
    %3 = vector.broadcast %2 : i32 to vector<32x1xi32>
    %4 = arith.remsi %0, %3 : vector<32x1xi32>
    %c0_i32_0 = arith.constant 0 : i32
    %5 = vector.broadcast %c0_i32_0 : i32 to vector<32x1xi32>
    %6 = arith.cmpi ne, %4, %5 : vector<32x1xi32>
    %c0_i32_1 = arith.constant 0 : i32
    %7 = vector.broadcast %c0_i32_1 : i32 to vector<32x1xi32>
    %8 = arith.cmpi slt, %4, %7 : vector<32x1xi32>
    %c0_i32_2 = arith.constant 0 : i32
    %9 = arith.cmpi slt, %2, %c0_i32_2 : i32
    %10 = vector.broadcast %9 : i1 to vector<32x1xi1>
    %11 = vector.broadcast %10 : vector<32x1xi1> to vector<32x1xi1>
    %12 = arith.xori %8, %11 : vector<32x1xi1>
    %13 = arith.andi %12, %6 : vector<32x1xi1>
    %14 = vector.broadcast %2 : i32 to vector<32x1xi32>
    %15 = arith.addi %4, %14 : vector<32x1xi32>
    %16 = arith.select %13, %15, %4 : vector<32x1xi1>, vector<32x1xi32>
    %c0_i32_3 = arith.constant 0 : i32
    %17 = vector.broadcast %c0_i32_3 : i32 to vector<32x1xi32>
    %18 = arith.cmpi eq, %16, %17 : vector<32x1xi32>
    %c31_i32 = arith.constant 31 : i32
    %19 = vector.broadcast %c31_i32 : i32 to vector<32x1xi32>
    %20 = arith.cmpi eq, %16, %19 : vector<32x1xi32>
    %c0 = arith.constant 0 : index
    %c0_4 = arith.constant 0 : index
    %21 = vector.load %arg1[%c0, %c0_4] : memref<32x128xbf16, #tpu.memory_space<vmem>>, vector<32x128xbf16>
    %22 = arith.extf %21 : vector<32x128xbf16> to vector<32x128xf32>
    %c1_i32_5 = arith.constant 1 : i32
    %23 = tpu.dynamic_rotate %22 by %c1_i32_5 dim 0 : vector<32x128xf32>, i32 -> vector<32x128xf32>
    %cst = arith.constant 0.000000e+00 : f32
    %24 = vector.shape_cast %18 : vector<32x1xi1> to vector<32x1xi1>
    %25 = vector.broadcast %24 : vector<32x1xi1> to vector<32x128xi1>
    %26 = vector.broadcast %cst : f32 to vector<32x128xf32>
    %27 = arith.select %25, %26, %23 : vector<32x128xi1>, vector<32x128xf32>
    %c31_i32_6 = arith.constant 31 : i32
    %28 = tpu.dynamic_rotate %22 by %c31_i32_6 dim 0 : vector<32x128xf32>, i32 -> vector<32x128xf32>
    %cst_7 = arith.constant 0.000000e+00 : f32
    %29 = vector.shape_cast %20 : vector<32x1xi1> to vector<32x1xi1>
    %30 = vector.broadcast %29 : vector<32x1xi1> to vector<32x128xi1>
    %31 = vector.broadcast %cst_7 : f32 to vector<32x128xf32>
    %32 = arith.select %30, %31, %28 : vector<32x128xi1>, vector<32x128xf32>
    %33 = arith.truncf %27 : vector<32x128xf32> to vector<32x128xbf16>
    %34 = arith.truncf %32 : vector<32x128xf32> to vector<32x128xbf16>
    %35 = tpu.concatenate %33, %21, %34 in 1 : vector<32x128xbf16>, vector<32x128xbf16>, vector<32x128xbf16> -> vector<32x384xbf16>
    %c0_8 = arith.constant 0 : index
    %c0_9 = arith.constant 0 : index
    %36 = vector.load %arg4[%c0_8, %c0_9] : memref<384x128xbf16, #tpu.memory_space<vmem>>, vector<384x128xbf16>
    %cst_10 = arith.constant dense<0.000000e+00> : vector<32x128xf32>
    %37 = tpu.matmul %35, %36, %cst_10 {dimension_numbers = #tpu.dot_dimension_numbers<[1], [0], [0], [1], [0, 0, 1, 1], [], []>} : vector<32x384xbf16>, vector<384x128xbf16>, vector<32x128xf32> -> vector<32x128xf32>
    %c0_11 = arith.constant 0 : index
    %c0_12 = arith.constant 0 : index
    %38 = vector.load %arg5[%c0_11, %c0_12] : memref<1x128xf32, #tpu.memory_space<vmem>>, vector<1x128xf32>
    %39 = vector.broadcast %38 : vector<1x128xf32> to vector<32x128xf32>
    %40 = arith.addf %37, %39 : vector<32x128xf32>
    %41 = arith.mulf %40, %40 : vector<32x128xf32>
    %42 = arith.mulf %40, %41 : vector<32x128xf32>
    %cst_13 = arith.constant 4.471500e-02 : f32
    %43 = vector.broadcast %cst_13 : f32 to vector<32x128xf32>
    %44 = arith.mulf %43, %42 : vector<32x128xf32>
    %45 = arith.addf %40, %44 : vector<32x128xf32>
    %cst_14 = arith.constant 0.797884583 : f32
    %46 = vector.broadcast %cst_14 : f32 to vector<32x128xf32>
    %47 = arith.mulf %46, %45 : vector<32x128xf32>
    %48 = math.tanh %47 : vector<32x128xf32>
    %cst_15 = arith.constant 1.000000e+00 : f32
    %49 = vector.broadcast %cst_15 : f32 to vector<32x128xf32>
    %50 = arith.addf %49, %48 : vector<32x128xf32>
    %cst_16 = arith.constant 5.000000e-01 : f32
    %51 = vector.broadcast %cst_16 : f32 to vector<32x128xf32>
    %52 = arith.mulf %51, %50 : vector<32x128xf32>
    %53 = arith.mulf %40, %52 : vector<32x128xf32>
    %54 = arith.truncf %53 : vector<32x128xf32> to vector<32x128xbf16>
    %c1_i32_17 = arith.constant 1 : i32
    %55 = tpu.dynamic_rotate %53 by %c1_i32_17 dim 0 : vector<32x128xf32>, i32 -> vector<32x128xf32>
    %cst_18 = arith.constant 0.000000e+00 : f32
    %56 = vector.shape_cast %18 : vector<32x1xi1> to vector<32x1xi1>
    %57 = vector.broadcast %56 : vector<32x1xi1> to vector<32x128xi1>
    %58 = vector.broadcast %cst_18 : f32 to vector<32x128xf32>
    %59 = arith.select %57, %58, %55 : vector<32x128xi1>, vector<32x128xf32>
    %c31_i32_19 = arith.constant 31 : i32
    %60 = tpu.dynamic_rotate %53 by %c31_i32_19 dim 0 : vector<32x128xf32>, i32 -> vector<32x128xf32>
    %cst_20 = arith.constant 0.000000e+00 : f32
    %61 = vector.shape_cast %20 : vector<32x1xi1> to vector<32x1xi1>
    %62 = vector.broadcast %61 : vector<32x1xi1> to vector<32x128xi1>
    %63 = vector.broadcast %cst_20 : f32 to vector<32x128xf32>
    %64 = arith.select %62, %63, %60 : vector<32x128xi1>, vector<32x128xf32>
    %65 = arith.truncf %59 : vector<32x128xf32> to vector<32x128xbf16>
    %66 = arith.truncf %64 : vector<32x128xf32> to vector<32x128xbf16>
    %67 = tpu.concatenate %65, %54, %66 in 1 : vector<32x128xbf16>, vector<32x128xbf16>, vector<32x128xbf16> -> vector<32x384xbf16>
    %c0_21 = arith.constant 0 : index
    %c0_22 = arith.constant 0 : index
    %68 = vector.load %arg6[%c0_21, %c0_22] : memref<384x128xbf16, #tpu.memory_space<vmem>>, vector<384x128xbf16>
    %cst_23 = arith.constant dense<0.000000e+00> : vector<32x128xf32>
    %69 = tpu.matmul %67, %68, %cst_23 {dimension_numbers = #tpu.dot_dimension_numbers<[1], [0], [0], [1], [0, 0, 1, 1], [], []>} : vector<32x384xbf16>, vector<384x128xbf16>, vector<32x128xf32> -> vector<32x128xf32>
    %c0_24 = arith.constant 0 : index
    %c0_25 = arith.constant 0 : index
    %70 = vector.load %arg7[%c0_24, %c0_25] : memref<1x128xf32, #tpu.memory_space<vmem>>, vector<1x128xf32>
    %71 = vector.broadcast %70 : vector<1x128xf32> to vector<32x128xf32>
    %72 = arith.addf %69, %71 : vector<32x128xf32>
    %73 = arith.mulf %72, %72 : vector<32x128xf32>
    %74 = arith.mulf %72, %73 : vector<32x128xf32>
    %cst_26 = arith.constant 4.471500e-02 : f32
    %75 = vector.broadcast %cst_26 : f32 to vector<32x128xf32>
    %76 = arith.mulf %75, %74 : vector<32x128xf32>
    %77 = arith.addf %72, %76 : vector<32x128xf32>
    %cst_27 = arith.constant 0.797884583 : f32
    %78 = vector.broadcast %cst_27 : f32 to vector<32x128xf32>
    %79 = arith.mulf %78, %77 : vector<32x128xf32>
    %80 = math.tanh %79 : vector<32x128xf32>
    %cst_28 = arith.constant 1.000000e+00 : f32
    %81 = vector.broadcast %cst_28 : f32 to vector<32x128xf32>
    %82 = arith.addf %81, %80 : vector<32x128xf32>
    %cst_29 = arith.constant 5.000000e-01 : f32
    %83 = vector.broadcast %cst_29 : f32 to vector<32x128xf32>
    %84 = arith.mulf %83, %82 : vector<32x128xf32>
    %85 = arith.mulf %72, %84 : vector<32x128xf32>
    %86 = vector.shape_cast %85 : vector<32x128xf32> to vector<1x32x128xf32>
    %c0_30 = arith.constant 0 : index
    %c0_31 = arith.constant 0 : index
    %87 = vector.load %arg3[%c0_30, %c0_31] : memref<32x128xf32, #tpu.memory_space<vmem>>, vector<32x128xf32>
    %88 = vector.shape_cast %87 : vector<32x128xf32> to vector<1x32x128xf32>
    %89 = arith.addf %86, %88 : vector<1x32x128xf32>
    %90 = vector.shape_cast %89 : vector<1x32x128xf32> to vector<32x128xf32>
    %cst_32 = arith.constant dense<0.000000e+00> : vector<32xf32>
    %91 = vector.multi_reduction <add>, %90, %cst_32 [1] : vector<32x128xf32> to vector<32xf32>
    %92 = vector.shape_cast %91 : vector<32xf32> to vector<32x1xf32>
    %cst_33 = arith.constant 3.125000e-02 : f32
    %93 = vector.broadcast %cst_33 : f32 to vector<32x1xf32>
    %94 = arith.mulf %92, %93 : vector<32x1xf32>
    %95 = arith.mulf %90, %90 : vector<32x128xf32>
    %cst_34 = arith.constant dense<0.000000e+00> : vector<32xf32>
    %96 = vector.multi_reduction <add>, %95, %cst_34 [1] : vector<32x128xf32> to vector<32xf32>
    %97 = vector.shape_cast %96 : vector<32xf32> to vector<32x1xf32>
    %cst_35 = arith.constant 3.125000e-02 : f32
    %98 = vector.broadcast %cst_35 : f32 to vector<32x1xf32>
    %99 = arith.mulf %97, %98 : vector<32x1xf32>
    %100 = arith.mulf %94, %94 : vector<32x1xf32>
    %101 = arith.subf %99, %100 : vector<32x1xf32>
    %102 = vector.broadcast %94 : vector<32x1xf32> to vector<32x128xf32>
    %103 = arith.subf %90, %102 : vector<32x128xf32>
    %cst_36 = arith.constant 9.99999974E-6 : f32
    %104 = vector.broadcast %cst_36 : f32 to vector<32x1xf32>
    %105 = arith.addf %101, %104 : vector<32x1xf32>
    %106 = math.rsqrt %105 : vector<32x1xf32>
    %107 = vector.broadcast %106 : vector<32x1xf32> to vector<32x128xf32>
    %108 = arith.mulf %103, %107 : vector<32x128xf32>
    %c0_37 = arith.constant 0 : index
    %c0_38 = arith.constant 0 : index
    %109 = vector.load %arg8[%c0_37, %c0_38] : memref<1x128xf32, #tpu.memory_space<vmem>>, vector<1x128xf32>
    %110 = vector.broadcast %109 : vector<1x128xf32> to vector<32x128xf32>
    %111 = arith.mulf %108, %110 : vector<32x128xf32>
    %c0_39 = arith.constant 0 : index
    %c0_40 = arith.constant 0 : index
    %112 = vector.load %arg9[%c0_39, %c0_40] : memref<1x128xf32, #tpu.memory_space<vmem>>, vector<1x128xf32>
    %113 = vector.broadcast %112 : vector<1x128xf32> to vector<32x128xf32>
    %114 = arith.addf %111, %113 : vector<32x128xf32>
    %c0_41 = arith.constant 0 : index
    %c0_42 = arith.constant 0 : index
    %115 = vector.load %arg2[%c0_41, %c0_42] : memref<32x128xf32, #tpu.memory_space<vmem>>, vector<32x128xf32>
    %116 = vector.extract_strided_slice %115 {offsets = [0, 0], sizes = [32, 1], strides = [1, 1]} : vector<32x128xf32> to vector<32x1xf32>
    %c0_43 = arith.constant 0 : index
    %c0_44 = arith.constant 0 : index
    %117 = vector.load %arg10[%c0_43, %c0_44] : memref<1x128xf32, #tpu.memory_space<vmem>>, vector<1x128xf32>
    %118 = vector.broadcast %116 : vector<32x1xf32> to vector<32x128xf32>
    %119 = vector.broadcast %117 : vector<1x128xf32> to vector<32x128xf32>
    %120 = arith.mulf %118, %119 : vector<32x128xf32>
    %121 = arith.addf %114, %120 : vector<32x128xf32>
    %122 = arith.truncf %121 : vector<32x128xf32> to vector<32x128xbf16>
    %c0_45 = arith.constant 0 : index
    %c0_46 = arith.constant 0 : index
    %123 = vector.load %arg11[%c0_45, %c0_46] : memref<128x128xbf16, #tpu.memory_space<vmem>>, vector<128x128xbf16>
    %cst_47 = arith.constant dense<0.000000e+00> : vector<32x128xf32>
    %124 = tpu.matmul %122, %123, %cst_47 {dimension_numbers = #tpu.dot_dimension_numbers<[1], [0], [0], [1], [0, 0, 1, 1], [], []>} : vector<32x128xbf16>, vector<128x128xbf16>, vector<32x128xf32> -> vector<32x128xf32>
    %c0_48 = arith.constant 0 : index
    %c0_49 = arith.constant 0 : index
    %125 = vector.load %arg12[%c0_48, %c0_49] : memref<1x128xf32, #tpu.memory_space<vmem>>, vector<1x128xf32>
    %126 = vector.broadcast %125 : vector<1x128xf32> to vector<32x128xf32>
    %127 = arith.addf %124, %126 : vector<32x128xf32>
    %128 = arith.mulf %127, %127 : vector<32x128xf32>
    %129 = arith.mulf %127, %128 : vector<32x128xf32>
    %cst_50 = arith.constant 4.471500e-02 : f32
    %130 = vector.broadcast %cst_50 : f32 to vector<32x128xf32>
    %131 = arith.mulf %130, %129 : vector<32x128xf32>
    %132 = arith.addf %127, %131 : vector<32x128xf32>
    %cst_51 = arith.constant 0.797884583 : f32
    %133 = vector.broadcast %cst_51 : f32 to vector<32x128xf32>
    %134 = arith.mulf %133, %132 : vector<32x128xf32>
    %135 = math.tanh %134 : vector<32x128xf32>
    %cst_52 = arith.constant 1.000000e+00 : f32
    %136 = vector.broadcast %cst_52 : f32 to vector<32x128xf32>
    %137 = arith.addf %136, %135 : vector<32x128xf32>
    %cst_53 = arith.constant 5.000000e-01 : f32
    %138 = vector.broadcast %cst_53 : f32 to vector<32x128xf32>
    %139 = arith.mulf %138, %137 : vector<32x128xf32>
    %140 = arith.mulf %127, %139 : vector<32x128xf32>
    %141 = arith.truncf %140 : vector<32x128xf32> to vector<32x128xbf16>
    %c0_54 = arith.constant 0 : index
    %c0_55 = arith.constant 0 : index
    %142 = vector.load %arg13[%c0_54, %c0_55] : memref<128x128xbf16, #tpu.memory_space<vmem>>, vector<128x128xbf16>
    %cst_56 = arith.constant dense<0.000000e+00> : vector<32x128xf32>
    %143 = tpu.matmul %141, %142, %cst_56 {dimension_numbers = #tpu.dot_dimension_numbers<[1], [0], [0], [1], [0, 0, 1, 1], [], []>} : vector<32x128xbf16>, vector<128x128xbf16>, vector<32x128xf32> -> vector<32x128xf32>
    %c0_57 = arith.constant 0 : index
    %c0_58 = arith.constant 0 : index
    %144 = vector.load %arg14[%c0_57, %c0_58] : memref<1x128xf32, #tpu.memory_space<vmem>>, vector<1x128xf32>
    %145 = vector.broadcast %144 : vector<1x128xf32> to vector<32x128xf32>
    %146 = arith.addf %143, %145 : vector<32x128xf32>
    %c0_59 = arith.constant 0 : index
    %c0_60 = arith.constant 0 : index
    %147 = vector.load %arg15[%c0_59, %c0_60] : memref<32x128xf32, #tpu.memory_space<vmem>>, vector<32x128xf32>
    tpu.vector_store %arg15[%c0_59, %c0_60], %146 {strides = array<i32>} : memref<32x128xf32, #tpu.memory_space<vmem>>, vector<32x128xf32>,
    return
  }
  func.func @transform_0(%arg0: i32) -> (i32, i32) {
    %c0_i32 = arith.constant 0 : i32
    %c0_i32_0 = arith.constant 0 : i32
    return %arg0, %c0_i32 : i32, i32
  }
  func.func @transform_1(%arg0: i32) -> (i32, i32) {
    %c0_i32 = arith.constant 0 : i32
    %c0_i32_0 = arith.constant 0 : i32
    return %arg0, %c0_i32 : i32, i32
  }
  func.func @transform_2(%arg0: i32) -> (i32, i32) {
    %c0_i32 = arith.constant 0 : i32
    %c0_i32_0 = arith.constant 0 : i32
    %c0_i32_1 = arith.constant 0 : i32
    return %c0_i32, %c0_i32_0 : i32, i32
  }
  func.func @transform_3(%arg0: i32) -> (i32, i32) {
    %c0_i32 = arith.constant 0 : i32
    %c0_i32_0 = arith.constant 0 : i32
    %c0_i32_1 = arith.constant 0 : i32
    return %c0_i32, %c0_i32_0 : i32, i32
  }
  func.func @transform_4(%arg0: i32) -> (i32, i32) {
    %c0_i32 = arith.constant 0 : i32
    %c0_i32_0 = arith.constant 0 : i32
    %c0_i32_1 = arith.constant 0 : i32
    return %c0_i32, %c0_i32_0 : i32, i32
  }
  func.func @transform_5(%arg0: i32) -> (i32, i32) {
    %c0_i32 = arith.constant 0 : i32
    %c0_i32_0 = arith.constant 0 : i32
    %c0_i32_1 = arith.constant 0 : i32
    return %c0_i32, %c0_i32_0 : i32, i32
  }
  func.func @transform_6(%arg0: i32) -> (i32, i32) {
    %c0_i32 = arith.constant 0 : i32
    %c0_i32_0 = arith.constant 0 : i32
    %c0_i32_1 = arith.constant 0 : i32
    return %c0_i32, %c0_i32_0 : i32, i32
  }
  func.func @transform_7(%arg0: i32) -> (i32, i32) {
    %c0_i32 = arith.constant 0 : i32
    %c0_i32_0 = arith.constant 0 : i32
    %c0_i32_1 = arith.constant 0 : i32
    return %c0_i32, %c0_i32_0 : i32, i32
  }
  func.func @transform_8(%arg0: i32) -> (i32, i32) {
    %c0_i32 = arith.constant 0 : i32
    %c0_i32_0 = arith.constant 0 : i32
    %c0_i32_1 = arith.constant 0 : i32
    return %c0_i32, %c0_i32_0 : i32, i32
  }
  func.func @transform_9(%arg0: i32) -> (i32, i32) {
    %c0_i32 = arith.constant 0 : i32
    %c0_i32_0 = arith.constant 0 : i32
    %c0_i32_1 = arith.constant 0 : i32
    return %c0_i32, %c0_i32_0 : i32, i32
  }
  func.func @transform_10(%arg0: i32) -> (i32, i32) {
    %c0_i32 = arith.constant 0 : i32
    %c0_i32_0 = arith.constant 0 : i32
    %c0_i32_1 = arith.constant 0 : i32
    return %c0_i32, %c0_i32_0 : i32, i32
  }
  func.func @transform_11(%arg0: i32) -> (i32, i32) {
    %c0_i32 = arith.constant 0 : i32
    %c0_i32_0 = arith.constant 0 : i32
    %c0_i32_1 = arith.constant 0 : i32
    return %c0_i32, %c0_i32_0 : i32, i32
  }
  func.func @transform_12(%arg0: i32) -> (i32, i32) {
    %c0_i32 = arith.constant 0 : i32
    %c0_i32_0 = arith.constant 0 : i32
    %c0_i32_1 = arith.constant 0 : i32
    return %c0_i32, %c0_i32_0 : i32, i32
  }
  func.func @transform_13(%arg0: i32) -> (i32, i32) {
    %c0_i32 = arith.constant 0 : i32
    %c0_i32_0 = arith.constant 0 : i32
    %c0_i32_1 = arith.constant 0 : i32
    return %c0_i32, %c0_i32_0 : i32, i32
  }
  func.func @transform_14(%arg0: i32) -> (i32, i32) {
    %c0_i32 = arith.constant 0 : i32
    %c0_i32_0 = arith.constant 0 : i32
    return %arg0, %c0_i32 : i32, i32
  }
}

</mosaic_0001>

<llo_original>
// kernel: mae_forward.1
$region0: #{mae_forward.1}
  #allocation0 [shape = 'u32[]', space=smem, size = 0x4, offset = 0x4, fixed_abs, tag = 'smem constant byte address 0x4 - core index']
  #allocation1 [shape = 'u32[72,128]{1,0:T(1,128)}', space=vmem, size = 0x9000, scoped, tag = 'internal scratch']
  %s0 = inlined_call_operand.vmem [shape: bf16[64,128], index: 0, kind: input, shape index: {}]
  %s1 = inlined_call_operand.vmem [shape: f32[64,128], index: 1, kind: input, shape index: {}]
  %s2 = inlined_call_operand.vmem [shape: f32[32,128], index: 2, kind: input, shape index: {}]
  %s3 = inlined_call_operand.vmem [shape: bf16[384,128], index: 3, kind: input, shape index: {}]
  %s4 = inlined_call_operand.vmem [shape: f32[1,128], index: 4, kind: input, shape index: {}]
  %s5 = inlined_call_operand.hbm [shape: bf16[384,128], index: 5, kind: input, shape index: {}]
  %s6 = inlined_call_operand.vmem [shape: f32[1,128], index: 6, kind: input, shape index: {}]
  %s7 = inlined_call_operand.vmem [shape: f32[1,128], index: 7, kind: input, shape index: {}]
  %s8 = inlined_call_operand.vmem [shape: f32[1,128], index: 8, kind: input, shape index: {}]
  %s9 = inlined_call_operand.vmem [shape: f32[1,128], index: 9, kind: input, shape index: {}]
  %s10 = inlined_call_operand.hbm [shape: bf16[128,128], index: 10, kind: input, shape index: {}]
  %s11 = inlined_call_operand.vmem [shape: f32[1,128], index: 11, kind: input, shape index: {}]
  %s12 = inlined_call_operand.hbm [shape: bf16[128,128], index: 12, kind: input, shape index: {}]
  %s13 = inlined_call_operand.vmem [shape: f32[1,128], index: 13, kind: input, shape index: {}]
  %s14 = inlined_call_operand.vmem [shape: f32[64,128], index: 14, kind: output, shape index: {}]
  %s15 = sld [smem:[#allocation0]]
  $region101: #{mae_forward.1} parent=0
    _
  %s17 = ssub.s32 1, %s15
  %s18 = scalar_select 0, %s17, %s15
  $region1: #{mae_forward.1} parent=0
    #allocation2 [shape = 'u8[98304]{0}', space=vmem, size = 0x18000, scoped, tag = 'input window, operand 5, single buffered']
    #allocation3 [shape = 's32[2]{0}', space=sflag, size = 0x8, scoped, tag = 'scoped memory for mae_forward.1']
    #allocation4 [shape = 'u8[32768]{0}', space=vmem, size = 0x8000, scoped, tag = 'input window, operand 10, single buffered']
    #allocation5 [shape = 's32[1]{0}', space=sflag, size = 0x4, scoped, tag = 'scoped memory for mae_forward.1']
    #allocation6 [shape = 'u8[32768]{0}', space=vmem, size = 0x8000, scoped, tag = 'input window, operand 12, single buffered']
    %19 = vsyncpa [#allocation3], 0
    %20 = vsyncpa [#allocation5], 0
    loop: start=0, step=1, limit=4
    $region2: #{mae_forward.1} parent=1 // loop_pre_header
      _
    $region3: #{mae_forward.1} parent=1 // loop_header
      %s22 = sphi 0, %s26
      %p23 = scmp.ge.s32.totalorder %s22, 4
      %s32 = sphi 0, %s34
      %s35 = sphi 0, %s32
      %s36 = sphi 0, %s35
      %s52 = sphi 0, %s36
      %s58 = sphi 0, %s60
      %s61 = sphi 0, %s58
      %s62 = sphi 0, %s61
      %s78 = sphi 0, %s62
      %s82 = sphi 0, %s82
      %s84 = sphi 0, %s82
      %s85 = sphi 0, %s84
      %s99 = sphi 0, %s85
      %s103 = sphi 0, %s103
      %s105 = sphi 0, %s103
      %s106 = sphi 0, %s105
      %s120 = sphi 0, %s106
      %s124 = sphi 0, %s124
      %s126 = sphi 0, %s124
      %s127 = sphi 0, %s126
      %s141 = sphi 0, %s127
      %s145 = sphi 0, %s145
      %s147 = sphi 0, %s145
      %s148 = sphi 0, %s147
      %s162 = sphi 0, %s148
      %s166 = sphi 0, %s166
      %s168 = sphi 0, %s166
      %s169 = sphi 0, %s168
      %s183 = sphi 0, %s169
      %s187 = sphi 0, %s187
      %s189 = sphi 0, %s187
      %s190 = sphi 0, %s189
      %s204 = sphi 0, %s190
      %s208 = sphi 0, %s208
      %s210 = sphi 0, %s208
      %s211 = sphi 0, %s210
      %s225 = sphi 0, %s211
      %s229 = sphi 0, %s229
      %s231 = sphi 0, %s229
      %s232 = sphi 0, %s231
      %s246 = sphi 0, %s232
      %s250 = sphi 0, %s250
      %s252 = sphi 0, %s250
      %s253 = sphi 0, %s252
      %s267 = sphi 0, %s253
      %s271 = sphi 0, %s271
      %s273 = sphi 0, %s271
      %s274 = sphi 0, %s273
      %s288 = sphi 0, %s274
      %s292 = sphi 0, %s292
      %s294 = sphi 0, %s292
      %s295 = sphi 0, %s294
      %s309 = sphi 0, %s295
      %s313 = sphi 0, %s313
      %s315 = sphi 0, %s313
      %s316 = sphi 0, %s315
      %s330 = sphi 0, %s316
      %s336 = sphi 0, %s338
      %s339 = sphi 0, %s336
      %s340 = sphi 0, %s339
      %s356 = sphi 0, %s340
    $region4: #{mae_forward.1} parent=1 // loop_header_branch
      %25 = sbr.rel (%p23) target = $region8
    $region5: #{mae_forward.1} parent=1 // loop_body
      %s27 = ssub.s32 %s22, 1
      %s28 = ssub.s32 %s22, 2
      %s29 = sadd.s32 %s22, 1
      %s30 = ssub.s32 %s22, %s29
      %p31 = scmp.eq.s32.totalorder %s30, 0
      %s33 = sadd.s32 %s32, 1
      %s34 = scalar_select %p31, %s32, %s33
      %p37 = pneg %p31
      %p38 = scmp.eq.s32.totalorder %s22, 1
      %p39 = por %p37, %p38
      %p40 = scmp.ne.s32.totalorder %s32, %s35
      %p41 = scmp.eq.s32.totalorder %s22, 0
      %p42 = por %p40, %p41
      %p43 = scmp.ne.s32.totalorder %s32, %s35
      %p44 = scmp.eq.s32.totalorder %s27, 1
      %p45 = por %p43, %p44
      %p46 = scmp.ne.s32.totalorder %s35, %s36
      %p47 = scmp.eq.s32.totalorder %s27, 0
      %p48 = por %p46, %p47
      %p49 = scmp.ne.s32.totalorder %s35, %s36
      %p50 = scmp.eq.s32.totalorder %s28, 1
      %p51 = por %p49, %p50
      %p53 = scmp.ne.s32.totalorder %s36, %s52
      %p54 = scmp.eq.s32.totalorder %s28, 0
      %p55 = por %p53, %p54
      %s56 = ssub.s32 %s22, %s29
      %p57 = scmp.eq.s32.totalorder %s56, 0
      %s59 = sadd.s32 %s58, 1
      %s60 = scalar_select %p57, %s58, %s59
      %p63 = pneg %p57
      %p64 = scmp.eq.s32.totalorder %s22, 1
      %p65 = por %p63, %p64
      %p66 = scmp.ne.s32.totalorder %s58, %s61
      %p67 = scmp.eq.s32.totalorder %s22, 0
      %p68 = por %p66, %p67
      %p69 = scmp.ne.s32.totalorder %s58, %s61
      %p70 = scmp.eq.s32.totalorder %s27, 1
      %p71 = por %p69, %p70
      %p72 = scmp.ne.s32.totalorder %s61, %s62
      %p73 = scmp.eq.s32.totalorder %s27, 0
      %p74 = por %p72, %p73
      %p75 = scmp.ne.s32.totalorder %s61, %s62
      %p76 = scmp.eq.s32.totalorder %s28, 1
      %p77 = por %p75, %p76
      %p79 = scmp.ne.s32.totalorder %s62, %s78
      %p80 = scmp.eq.s32.totalorder %s28, 0
      %p81 = por %p79, %p80
      %s83 = sadd.s32 %s82, 1
      %p86 = scmp.eq.s32.totalorder %s22, 1
      %p87 = scmp.ne.s32.totalorder %s82, %s84
      %p88 = scmp.eq.s32.totalorder %s22, 0
      %p89 = por %p87, %p88
      %p90 = scmp.ne.s32.totalorder %s82, %s84
      %p91 = scmp.eq.s32.totalorder %s27, 1
      %p92 = por %p90, %p91
      %p93 = scmp.ne.s32.totalorder %s84, %s85
      %p94 = scmp.eq.s32.totalorder %s27, 0
      %p95 = por %p93, %p94
      %p96 = scmp.ne.s32.totalorder %s84, %s85
      %p97 = scmp.eq.s32.totalorder %s28, 1
      %p98 = por %p96, %p97
      %p100 = scmp.ne.s32.totalorder %s85, %s99
      %p101 = scmp.eq.s32.totalorder %s28, 0
      %p102 = por %p100, %p101
      %s104 = sadd.s32 %s103, 1
      %p107 = scmp.eq.s32.totalorder %s22, 1
      %p108 = scmp.ne.s32.totalorder %s103, %s105
      %p109 = scmp.eq.s32.totalorder %s22, 0
      %p110 = por %p108, %p109
      %p111 = scmp.ne.s32.totalorder %s103, %s105
      %p112 = scmp.eq.s32.totalorder %s27, 1
      %p113 = por %p111, %p112
      %p114 = scmp.ne.s32.totalorder %s105, %s106
      %p115 = scmp.eq.s32.totalorder %s27, 0
      %p116 = por %p114, %p115
      %p117 = scmp.ne.s32.totalorder %s105, %s106
      %p118 = scmp.eq.s32.totalorder %s28, 1
      %p119 = por %p117, %p118
      %p121 = scmp.ne.s32.totalorder %s106, %s120
      %p122 = scmp.eq.s32.totalorder %s28, 0
      %p123 = por %p121, %p122
      %s125 = sadd.s32 %s124, 1
      %p128 = scmp.eq.s32.totalorder %s22, 1
      %p129 = scmp.ne.s32.totalorder %s124, %s126
      %p130 = scmp.eq.s32.totalorder %s22, 0
      %p131 = por %p129, %p130
      %p132 = scmp.ne.s32.totalorder %s124, %s126
      %p133 = scmp.eq.s32.totalorder %s27, 1
      %p134 = por %p132, %p133
      %p135 = scmp.ne.s32.totalorder %s126, %s127
      %p136 = scmp.eq.s32.totalorder %s27, 0
      %p137 = por %p135, %p136
      %p138 = scmp.ne.s32.totalorder %s126, %s127
      %p139 = scmp.eq.s32.totalorder %s28, 1
      %p140 = por %p138, %p139
      %p142 = scmp.ne.s32.totalorder %s127, %s141
      %p143 = scmp.eq.s32.totalorder %s28, 0
      %p144 = por %p142, %p143
      %s146 = sadd.s32 %s145, 1
      %p149 = scmp.eq.s32.totalorder %s22, 1
      %p150 = scmp.ne.s32.totalorder %s145, %s147
      %p151 = scmp.eq.s32.totalorder %s22, 0
      %p152 = por %p150, %p151
      %p153 = scmp.ne.s32.totalorder %s145, %s147
      %p154 = scmp.eq.s32.totalorder %s27, 1
      %p155 = por %p153, %p154
      %p156 = scmp.ne.s32.totalorder %s147, %s148
      %p157 = scmp.eq.s32.totalorder %s27, 0
      %p158 = por %p156, %p157
      %p159 = scmp.ne.s32.totalorder %s147, %s148
      %p160 = scmp.eq.s32.totalorder %s28, 1
      %p161 = por %p159, %p160
      %p163 = scmp.ne.s32.totalorder %s148, %s162
      %p164 = scmp.eq.s32.totalorder %s28, 0
      %p165 = por %p163, %p164
      %s167 = sadd.s32 %s166, 1
      %p170 = scmp.eq.s32.totalorder %s22, 1
      %p171 = scmp.ne.s32.totalorder %s166, %s168
      %p172 = scmp.eq.s32.totalorder %s22, 0
      %p173 = por %p171, %p172
      %p174 = scmp.ne.s32.totalorder %s166, %s168
      %p175 = scmp.eq.s32.totalorder %s27, 1
      %p176 = por %p174, %p175
      %p177 = scmp.ne.s32.totalorder %s168, %s169
      %p178 = scmp.eq.s32.totalorder %s27, 0
      %p179 = por %p177, %p178
      %p180 = scmp.ne.s32.totalorder %s168, %s169
      %p181 = scmp.eq.s32.totalorder %s28, 1
      %p182 = por %p180, %p181
      %p184 = scmp.ne.s32.totalorder %s169, %s183
      %p185 = scmp.eq.s32.totalorder %s28, 0
      %p186 = por %p184, %p185
      %s188 = sadd.s32 %s187, 1
      %p191 = scmp.eq.s32.totalorder %s22, 1
      %p192 = scmp.ne.s32.totalorder %s187, %s189
      %p193 = scmp.eq.s32.totalorder %s22, 0
      %p194 = por %p192, %p193
      %p195 = scmp.ne.s32.totalorder %s187, %s189
      %p196 = scmp.eq.s32.totalorder %s27, 1
      %p197 = por %p195, %p196
      %p198 = scmp.ne.s32.totalorder %s189, %s190
      %p199 = scmp.eq.s32.totalorder %s27, 0
      %p200 = por %p198, %p199
      %p201 = scmp.ne.s32.totalorder %s189, %s190
      %p202 = scmp.eq.s32.totalorder %s28, 1
      %p203 = por %p201, %p202
      %p205 = scmp.ne.s32.totalorder %s190, %s204
      %p206 = scmp.eq.s32.totalorder %s28, 0
      %p207 = por %p205, %p206
      %s209 = sadd.s32 %s208, 1
      %p212 = scmp.eq.s32.totalorder %s22, 1
      %p213 = scmp.ne.s32.totalorder %s208, %s210
      %p214 = scmp.eq.s32.totalorder %s22, 0
      %p215 = por %p213, %p214
      %p216 = scmp.ne.s32.totalorder %s208, %s210
      %p217 = scmp.eq.s32.totalorder %s27, 1
      %p218 = por %p216, %p217
      %p219 = scmp.ne.s32.totalorder %s210, %s211
      %p220 = scmp.eq.s32.totalorder %s27, 0
      %p221 = por %p219, %p220
      %p222 = scmp.ne.s32.totalorder %s210, %s211
      %p223 = scmp.eq.s32.totalorder %s28, 1
      %p224 = por %p222, %p223
      %p226 = scmp.ne.s32.totalorder %s211, %s225
      %p227 = scmp.eq.s32.totalorder %s28, 0
      %p228 = por %p226, %p227
      %s230 = sadd.s32 %s229, 1
      %p233 = scmp.eq.s32.totalorder %s22, 1
      %p234 = scmp.ne.s32.totalorder %s229, %s231
      %p235 = scmp.eq.s32.totalorder %s22, 0
      %p236 = por %p234, %p235
      %p237 = scmp.ne.s32.totalorder %s229, %s231
      %p238 = scmp.eq.s32.totalorder %s27, 1
      %p239 = por %p237, %p238
      %p240 = scmp.ne.s32.totalorder %s231, %s232
      %p241 = scmp.eq.s32.totalorder %s27, 0
      %p242 = por %p240, %p241
      %p243 = scmp.ne.s32.totalorder %s231, %s232
      %p244 = scmp.eq.s32.totalorder %s28, 1
      %p245 = por %p243, %p244
      %p247 = scmp.ne.s32.totalorder %s232, %s246
      %p248 = scmp.eq.s32.totalorder %s28, 0
      %p249 = por %p247, %p248
      %s251 = sadd.s32 %s250, 1
      %p254 = scmp.eq.s32.totalorder %s22, 1
      %p255 = scmp.ne.s32.totalorder %s250, %s252
      %p256 = scmp.eq.s32.totalorder %s22, 0
      %p257 = por %p255, %p256
      %p258 = scmp.ne.s32.totalorder %s250, %s252
      %p259 = scmp.eq.s32.totalorder %s27, 1
      %p260 = por %p258, %p259
      %p261 = scmp.ne.s32.totalorder %s252, %s253
      %p262 = scmp.eq.s32.totalorder %s27, 0
      %p263 = por %p261, %p262
      %p264 = scmp.ne.s32.totalorder %s252, %s253
      %p265 = scmp.eq.s32.totalorder %s28, 1
      %p266 = por %p264, %p265
      %p268 = scmp.ne.s32.totalorder %s253, %s267
      %p269 = scmp.eq.s32.totalorder %s28, 0
      %p270 = por %p268, %p269
      %s272 = sadd.s32 %s271, 1
      %p275 = scmp.eq.s32.totalorder %s22, 1
      %p276 = scmp.ne.s32.totalorder %s271, %s273
      %p277 = scmp.eq.s32.totalorder %s22, 0
      %p278 = por %p276, %p277
      %p279 = scmp.ne.s32.totalorder %s271, %s273
      %p280 = scmp.eq.s32.totalorder %s27, 1
      %p281 = por %p279, %p280
      %p282 = scmp.ne.s32.totalorder %s273, %s274
      %p283 = scmp.eq.s32.totalorder %s27, 0
      %p284 = por %p282, %p283
      %p285 = scmp.ne.s32.totalorder %s273, %s274
      %p286 = scmp.eq.s32.totalorder %s28, 1
      %p287 = por %p285, %p286
      %p289 = scmp.ne.s32.totalorder %s274, %s288
      %p290 = scmp.eq.s32.totalorder %s28, 0
      %p291 = por %p289, %p290
      %s293 = sadd.s32 %s292, 1
      %p296 = scmp.eq.s32.totalorder %s22, 1
      %p297 = scmp.ne.s32.totalorder %s292, %s294
      %p298 = scmp.eq.s32.totalorder %s22, 0
      %p299 = por %p297, %p298
      %p300 = scmp.ne.s32.totalorder %s292, %s294
      %p301 = scmp.eq.s32.totalorder %s27, 1
      %p302 = por %p300, %p301
      %p303 = scmp.ne.s32.totalorder %s294, %s295
      %p304 = scmp.eq.s32.totalorder %s27, 0
      %p305 = por %p303, %p304
      %p306 = scmp.ne.s32.totalorder %s294, %s295
      %p307 = scmp.eq.s32.totalorder %s28, 1
      %p308 = por %p306, %p307
      %p310 = scmp.ne.s32.totalorder %s295, %s309
      %p311 = scmp.eq.s32.totalorder %s28, 0
      %p312 = por %p310, %p311
      %s314 = sadd.s32 %s313, 1
      %p317 = scmp.eq.s32.totalorder %s22, 1
      %p318 = scmp.ne.s32.totalorder %s313, %s315
      %p319 = scmp.eq.s32.totalorder %s22, 0
      %p320 = por %p318, %p319
      %p321 = scmp.ne.s32.totalorder %s313, %s315
      %p322 = scmp.eq.s32.totalorder %s27, 1
      %p323 = por %p321, %p322
      %p324 = scmp.ne.s32.totalorder %s315, %s316
      %p325 = scmp.eq.s32.totalorder %s27, 0
      %p326 = por %p324, %p325
      %p327 = scmp.ne.s32.totalorder %s315, %s316
      %p328 = scmp.eq.s32.totalorder %s28, 1
      %p329 = por %p327, %p328
      %p331 = scmp.ne.s32.totalorder %s316, %s330
      %p332 = scmp.eq.s32.totalorder %s28, 0
      %p333 = por %p331, %p332
      %s334 = ssub.s32 %s22, %s29
      %p335 = scmp.eq.s32.totalorder %s334, 0
      %s337 = sadd.s32 %s336, 1
      %s338 = scalar_select %p335, %s336, %s337
      %p341 = pneg %p335
      %p342 = scmp.eq.s32.totalorder %s22, 1
      %p343 = por %p341, %p342
      %p344 = scmp.ne.s32.totalorder %s336, %s339
      %p345 = scmp.eq.s32.totalorder %s22, 0
      %p346 = por %p344, %p345
      %p347 = scmp.ne.s32.totalorder %s336, %s339
      %p348 = scmp.eq.s32.totalorder %s27, 1
      %p349 = por %p347, %p348
      %p350 = scmp.ne.s32.totalorder %s339, %s340
      %p351 = scmp.eq.s32.totalorder %s27, 0
      %p352 = por %p350, %p351
      %p353 = scmp.ne.s32.totalorder %s339, %s340
      %p354 = scmp.eq.s32.totalorder %s28, 1
      %p355 = por %p353, %p354
      %p357 = scmp.ne.s32.totalorder %s340, %s356
      %p358 = scmp.eq.s32.totalorder %s28, 0
      %p359 = por %p357, %p358
      %p360 = scmp.le.s32.totalorder 1, %s22
      %p361 = scmp.lt.s32.totalorder %s22, 3
      %p362 = pnand %p360, %p361
      %p363 = pneg %p362
      // Predicated region
      $region9: #{mae_forward.1} parent=5 // pred_check
        _
      $region10: #{mae_forward.1} parent=5 // pred_check_branch
        %365 = sbr.rel (%p362) target = $region12
      $region11: #{mae_forward.1} parent=5 // pred_region
        %s366 = ssub.s32 %s22, 1
        // Predicated region
        $region13: #{mae_forward.1} parent=11 // pred_check
          %p367 = pneg %p95
        $region14: #{mae_forward.1} parent=11 // pred_check_branch
          %369 = sbr.rel (%p367) target = $region16
        $region15: #{mae_forward.1} parent=11 // pred_region
          _
        $region16: #{mae_forward.1} parent=11 // pred_fallthru
          _
        // Predicated region
        $region17: #{mae_forward.1} parent=11 // pred_check
          %p370 = pneg %p116
        $region18: #{mae_forward.1} parent=11 // pred_check_branch
          %372 = sbr.rel (%p370) target = $region20
        $region19: #{mae_forward.1} parent=11 // pred_region
          _
        $region20: #{mae_forward.1} parent=11 // pred_fallthru
          _
        // Predicated region
        $region21: #{mae_forward.1} parent=11 // pred_check
          %p373 = pneg %p137
        $region22: #{mae_forward.1} parent=11 // pred_check_branch
          %375 = sbr.rel (%p373) target = $region24
        $region23: #{mae_forward.1} parent=11 // pred_region
          _
        $region24: #{mae_forward.1} parent=11 // pred_fallthru
          _
        // Predicated region
        $region25: #{mae_forward.1} parent=11 // pred_check
          %p376 = pneg %p158
        $region26: #{mae_forward.1} parent=11 // pred_check_branch
          %378 = sbr.rel (%p376) target = $region28
        $region27: #{mae_forward.1} parent=11 // pred_region
          %380 = vsyncadd [#allocation3], 0
          %s381 = sshll.u32 %s5, 4
          %s382 = int_to_ptr.hbm [resolvable:$true] %s381
          %s383 = sshll.u32 [#allocation2], 4
          %s384 = int_to_ptr.vmem [resolvable:$true] %s383
          %389 = dma.hbm_to_vmem [thread:$0]  %s382, 3072, %s384, [#allocation3], 64, 64, 4
        $region28: #{mae_forward.1} parent=11 // pred_fallthru
          _
        // Predicated region
        $region29: #{mae_forward.1} parent=11 // pred_check
          %p390 = pneg %p179
        $region30: #{mae_forward.1} parent=11 // pred_check_branch
          %392 = sbr.rel (%p390) target = $region32
        $region31: #{mae_forward.1} parent=11 // pred_region
          _
        $region32: #{mae_forward.1} parent=11 // pred_fallthru
          _
        // Predicated region
        $region33: #{mae_forward.1} parent=11 // pred_check
          %p393 = pneg %p200
        $region34: #{mae_forward.1} parent=11 // pred_check_branch
          %395 = sbr.rel (%p393) target = $region36
        $region35: #{mae_forward.1} parent=11 // pred_region
          _
        $region36: #{mae_forward.1} parent=11 // pred_fallthru
          _
        // Predicated region
        $region37: #{mae_forward.1} parent=11 // pred_check
          %p396 = pneg %p221
        $region38: #{mae_forward.1} parent=11 // pred_check_branch
          %398 = sbr.rel (%p396) target = $region40
        $region39: #{mae_forward.1} parent=11 // pred_region
          _
        $region40: #{mae_forward.1} parent=11 // pred_fallthru
          _
        // Predicated region
        $region41: #{mae_forward.1} parent=11 // pred_check
          %p399 = pneg %p242
        $region42: #{mae_forward.1} parent=11 // pred_check_branch
          %401 = sbr.rel (%p399) target = $region44
        $region43: #{mae_forward.1} parent=11 // pred_region
          _
        $region44: #{mae_forward.1} parent=11 // pred_fallthru
          _
        // Predicated region
        $region45: #{mae_forward.1} parent=11 // pred_check
          %p402 = pneg %p263
        $region46: #{mae_forward.1} parent=11 // pred_check_branch
          %404 = sbr.rel (%p402) target = $region48
        $region47: #{mae_forward.1} parent=11 // pred_region
          %406 = vsyncadd [#allocation5], 0
          %s407 = sshll.u32 %s10, 4
          %s408 = int_to_ptr.hbm [resolvable:$true] %s407
          %s409 = sshll.u32 [#allocation4], 4
          %s410 = int_to_ptr.vmem [resolvable:$true] %s409
          %415 = dma.hbm_to_vmem [thread:$0]  %s408, 1024, %s410, [#allocation5], 64, 64, 4
        $region48: #{mae_forward.1} parent=11 // pred_fallthru
          _
        // Predicated region
        $region49: #{mae_forward.1} parent=11 // pred_check
          %p416 = pneg %p284
        $region50: #{mae_forward.1} parent=11 // pred_check_branch
          %418 = sbr.rel (%p416) target = $region52
        $region51: #{mae_forward.1} parent=11 // pred_region
          _
        $region52: #{mae_forward.1} parent=11 // pred_fallthru
          _
        // Predicated region
        $region53: #{mae_forward.1} parent=11 // pred_check
          %p419 = pneg %p305
        $region54: #{mae_forward.1} parent=11 // pred_check_branch
          %421 = sbr.rel (%p419) target = $region56
        $region55: #{mae_forward.1} parent=11 // pred_region
          %423 = vsyncadd [#allocation5], 0
          %s424 = sshll.u32 %s12, 4
          %s425 = int_to_ptr.hbm [resolvable:$true] %s424
          %s426 = sshll.u32 [#allocation6], 4
          %s427 = int_to_ptr.vmem [resolvable:$true] %s426
          %432 = dma.hbm_to_vmem [thread:$0]  %s425, 1024, %s427, [#allocation5], 64, 64, 4
        $region56: #{mae_forward.1} parent=11 // pred_fallthru
          _
        // Predicated region
        $region57: #{mae_forward.1} parent=11 // pred_check
          %p433 = pneg %p326
        $region58: #{mae_forward.1} parent=11 // pred_check_branch
          %435 = sbr.rel (%p433) target = $region60
        $region59: #{mae_forward.1} parent=11 // pred_region
          _
        $region60: #{mae_forward.1} parent=11 // pred_fallthru
          _
      $region12: #{mae_forward.1} parent=5 // pred_fallthru
        _
      %p436 = scmp.lt.s32.totalorder %s22, 2
      // Predicated region
      $region61: #{mae_forward.1} parent=5 // pred_check
        %p437 = pneg %p436
      $region62: #{mae_forward.1} parent=5 // pred_check_branch
        %439 = sbr.rel (%p437) target = $region64
      $region63: #{mae_forward.1} parent=5 // pred_region
        // Predicated region
        $region65: #{mae_forward.1} parent=63 // pred_check
          %p440 = pneg %p42
        $region66: #{mae_forward.1} parent=63 // pred_check_branch
          %442 = sbr.rel (%p440) target = $region68
        $region67: #{mae_forward.1} parent=63 // pred_region
          %s443 = smul.u32 4, %s22
          %p444 = scmp.lt.s32.totalorder %s443, 7
          %s445 = scalar_select %p444, %s443, 7
          %s446 = smul.addr %s445, 4
          %s447 = scalar_lea.vmem %s0, %s446
          %s448 = smul.u32 4, %s22
        $region68: #{mae_forward.1} parent=63 // pred_fallthru
          _
        // Predicated region
        $region69: #{mae_forward.1} parent=63 // pred_check
          %p449 = pneg %p68
        $region70: #{mae_forward.1} parent=63 // pred_check_branch
          %451 = sbr.rel (%p449) target = $region72
        $region71: #{mae_forward.1} parent=63 // pred_region
          %s452 = smul.u32 4, %s22
          %p453 = scmp.lt.s32.totalorder %s452, 7
          %s454 = scalar_select %p453, %s452, 7
          %s455 = smul.addr %s454, 8
          %s456 = scalar_lea.vmem %s1, %s455
          %s457 = smul.u32 4, %s22
        $region72: #{mae_forward.1} parent=63 // pred_fallthru
          _
      $region64: #{mae_forward.1} parent=5 // pred_fallthru
        _
      %p458 = scmp.le.s32.totalorder 1, %s22
      %p459 = scmp.lt.s32.totalorder %s22, 3
      %p460 = pnand %p458, %p459
      %p461 = pneg %p460
      // Predicated region
      $region73: #{mae_forward.1} parent=5 // pred_check
        _
      $region74: #{mae_forward.1} parent=5 // pred_check_branch
        %463 = sbr.rel (%p460) target = $region76
      $region75: #{mae_forward.1} parent=5 // pred_region
        %s464 = ssub.s32 %s22, 1
        // Predicated region
        $region77: #{mae_forward.1} parent=75 // pred_check
          %p465 = pneg %p158
        $region78: #{mae_forward.1} parent=75 // pred_check_branch
          %467 = sbr.rel (%p465) target = $region80
        $region79: #{mae_forward.1} parent=75 // pred_region
          %469 = dma.done [#allocation3], 3072
        $region80: #{mae_forward.1} parent=75 // pred_fallthru
          _
        // Predicated region
        $region81: #{mae_forward.1} parent=75 // pred_check
          %p470 = pneg %p263
        $region82: #{mae_forward.1} parent=75 // pred_check_branch
          %472 = sbr.rel (%p470) target = $region84
        $region83: #{mae_forward.1} parent=75 // pred_region
          %474 = dma.done [#allocation5], 1024
        $region84: #{mae_forward.1} parent=75 // pred_fallthru
          _
        // Predicated region
        $region85: #{mae_forward.1} parent=75 // pred_check
          %p475 = pneg %p305
        $region86: #{mae_forward.1} parent=75 // pred_check_branch
          %477 = sbr.rel (%p475) target = $region88
        $region87: #{mae_forward.1} parent=75 // pred_region
          %479 = dma.done [#allocation5], 1024
        $region88: #{mae_forward.1} parent=75 // pred_fallthru
          _
        %s480 = smul.u32 4, %s27
        %p481 = scmp.lt.s32.totalorder %s480, 7
        %s482 = scalar_select %p481, %s480, 7
        %s483 = smul.addr %s482, 4
        %s484 = scalar_lea.vmem %s0, %s483
        %p485 = pneg %p48
        %p486 = pneg %p45
        %s487 = smul.u32 4, %s27
        %p488 = scmp.lt.s32.totalorder %s487, 7
        %s489 = scalar_select %p488, %s487, 7
        %s490 = smul.addr %s489, 8
        %s491 = scalar_lea.vmem %s1, %s490
        %p492 = pneg %p74
        %p493 = pneg %p71
        %p494 = pneg %p95
        %p495 = pneg %p92
        %p496 = pneg %p116
        %p497 = pneg %p113
        %p498 = pneg %p137
        %p499 = pneg %p134
        %p500 = pneg %p158
        %p501 = pneg %p155
        %p502 = pneg %p179
        %p503 = pneg %p176
        %p504 = pneg %p200
        %p505 = pneg %p197
        %p506 = pneg %p221
        %p507 = pneg %p218
        %p508 = pneg %p242
        %p509 = pneg %p239
        %p510 = pneg %p263
        %p511 = pneg %p260
        %p512 = pneg %p284
        %p513 = pneg %p281
        %p514 = pneg %p305
        %p515 = pneg %p302
        %p516 = pneg %p326
        %p517 = pneg %p323
        %p518 = pneg %p352
        %p519 = pneg %p349
        %s520 = smul.u32 4, %s27
        %p521 = scmp.lt.s32.totalorder %s520, 7
        %s522 = scalar_select %p521, %s520, 7
        %s523 = smul.addr %s522, 8
        %s524 = scalar_lea.vmem %s14, %s523
        %s525 = smul.u32 4, %s27
        %p526 = scmp.lt.s32.totalorder %s525, 7
        %s527 = scalar_select %p526, %s525, 7
        %s528 = smul.addr %s527, 4
        %s529 = scalar_lea.vmem %s0, %s528
        %s530 = smul.u32 4, %s27
        %s531 = smul.u32 4, %s27
        %p532 = scmp.lt.s32.totalorder %s531, 7
        %s533 = scalar_select %p532, %s531, 7
        %s534 = smul.addr %s533, 8
        %s535 = scalar_lea.vmem %s1, %s534
        %s536 = smul.u32 4, %s27
        %s537 = smul.u32 4, %s27
        %p538 = scmp.lt.s32.totalorder %s537, 7
        %s539 = scalar_select %p538, %s537, 7
        %s540 = smul.addr %s539, 8
        %s541 = scalar_lea.vmem %s14, %s540
        %s542 = smul.u32 4, %s27
        %v543 = vlaneseq
        %v544 = vshrl.u32 %v543, 7
        %v545 = vadd.s32 %v544, 8
        %v546 = vadd.s32 %v544, 16
        %v547 = vadd.s32 %v544, 24
        %vm548 = vcmp.lt.s32.totalorder %v544, 0
        %v549 = vsub.s32 0, %v544
        %v550 = vsel %vm548, %v549, %v544
        %v551 = vshrl.u32 %v550, 5
        %v552 = vand.u32 %v550, 31
        %v553 = vsub.s32 0, %v552
        %v554 = vsel %vm548, %v553, %v552
        %vm555 = vcmp.lt.s32.totalorder %v545, 0
        %v556 = vsub.s32 0, %v545
        %v557 = vsel %vm555, %v556, %v545
        %v558 = vshrl.u32 %v557, 5
        %v559 = vand.u32 %v557, 31
        %v560 = vsub.s32 0, %v559
        %v561 = vsel %vm555, %v560, %v559
        %vm562 = vcmp.lt.s32.totalorder %v546, 0
        %v563 = vsub.s32 0, %v546
        %v564 = vsel %vm562, %v563, %v546
        %v565 = vshrl.u32 %v564, 5
        %v566 = vand.u32 %v564, 31
        %v567 = vsub.s32 0, %v566
        %v568 = vsel %vm562, %v567, %v566
        %vm569 = vcmp.lt.s32.totalorder %v547, 0
        %v570 = vsub.s32 0, %v547
        %v571 = vsel %vm569, %v570, %v547
        %v572 = vshrl.u32 %v571, 5
        %v573 = vand.u32 %v571, 31
        %v574 = vsub.s32 0, %v573
        %v575 = vsel %vm569, %v574, %v573
        %vm576 = vcmp.ne.s32.totalorder %v554, 0
        %vm577 = vcmp.ne.s32.totalorder %v561, 0
        %vm578 = vcmp.ne.s32.totalorder %v568, 0
        %vm579 = vcmp.ne.s32.totalorder %v575, 0
        %vm580 = vcmp.lt.s32.totalorder %v554, 0
        %vm581 = vcmp.lt.s32.totalorder %v561, 0
        %vm582 = vcmp.lt.s32.totalorder %v568, 0
        %vm583 = vcmp.lt.s32.totalorder %v575, 0
        %vm584 = vmand %vm580, %vm576
        %vm585 = vmand %vm581, %vm577
        %vm586 = vmand %vm582, %vm578
        %vm587 = vmand %vm583, %vm579
        %v588 = vadd.s32 %v554, 32
        %v589 = vadd.s32 %v561, 32
        %v590 = vadd.s32 %v568, 32
        %v591 = vadd.s32 %v575, 32
        %v592 = vsel %vm584, %v588, %v554
        %v593 = vsel %vm585, %v589, %v561
        %v594 = vsel %vm586, %v590, %v568
        %v595 = vsel %vm587, %v591, %v575
        %vm596 = vcmp.eq.s32.totalorder %v592, 0
        %vm597 = vcmp.eq.s32.totalorder %v593, 0
        %vm598 = vcmp.eq.s32.totalorder %v594, 0
        %vm599 = vcmp.eq.s32.totalorder %v595, 0
        %vm600 = vcmp.eq.s32.totalorder %v592, 31
        %vm601 = vcmp.eq.s32.totalorder %v593, 31
        %vm602 = vcmp.eq.s32.totalorder %v594, 31
        %vm603 = vcmp.eq.s32.totalorder %v595, 31
        %v604 = vld [vmem:[%s529] sm:$0xf]
        %v605 = vld [vmem:[%s529 + $0x4] sm:$0xf]
        %v606 = vld [vmem:[%s529 + $0x8] sm:$0xf]
        %v607 = vld [vmem:[%s529 + $0xc] sm:$0xf]
        %v608 = vunpack.c.l.bf16 %v604
        %v609 = vunpack.c.l.bf16 %v605
        %v610 = vunpack.c.l.bf16 %v606
        %v611 = vunpack.c.l.bf16 %v607
        %v612 = vrot.slane %v608, 7
        %v613 = vrot.slane %v609, 7
        %v614 = vrot.slane %v610, 7
        %v615 = vrot.slane %v611, 7
        %vm616 = vcmp.lt.s32.totalorder %v544, 1
        %v617 = vsel %vm616, %v614, %v615
        %v618 = vsel %vm616, %v613, %v614
        %v619 = vsel %vm616, %v612, %v613
        %v620 = vsel %vm616, %v615, %v612
        %v621 = vsel %vm596, 1, 0
        %v622 = vsel %vm597, 1, 0
        %v623 = vsel %vm598, 1, 0
        %v624 = vsel %vm599, 1, 0
        %vm625 = vcmp.eq.s32.totalorder %v621, 1
        %vm626 = vcmp.eq.s32.totalorder %v622, 1
        %vm627 = vcmp.eq.s32.totalorder %v623, 1
        %vm628 = vcmp.eq.s32.totalorder %v624, 1
        %v629 = vsel %vm625, 0.0, %v620
        %v630 = vsel %vm626, 0.0, %v619
        %v631 = vsel %vm627, 0.0, %v618
        %v632 = vsel %vm628, 0.0, %v617
        %v633 = vrot.slane %v608, 1
        %v634 = vrot.slane %v609, 1
        %v635 = vrot.slane %v610, 1
        %v636 = vrot.slane %v611, 1
        %vm637 = vcmp.lt.s32.totalorder %v544, 7
        %v638 = vsel %vm637, %v635, %v636
        %v639 = vsel %vm637, %v634, %v635
        %v640 = vsel %vm637, %v633, %v634
        %v641 = vsel %vm637, %v636, %v633
        %v642 = vsel %vm600, 1, 0
        %v643 = vsel %vm601, 1, 0
        %v644 = vsel %vm602, 1, 0
        %v645 = vsel %vm603, 1, 0
        %vm646 = vcmp.eq.s32.totalorder %v642, 1
        %vm647 = vcmp.eq.s32.totalorder %v643, 1
        %vm648 = vcmp.eq.s32.totalorder %v644, 1
        %vm649 = vcmp.eq.s32.totalorder %v645, 1
        %v650 = vsel %vm646, 0.0, %v640
        %v651 = vsel %vm647, 0.0, %v639
        %v652 = vsel %vm648, 0.0, %v638
        %v653 = vsel %vm649, 0.0, %v641
        %v654 = vpack.c.bf16 %v629, %v629
        %v655 = vpack.c.bf16 %v630, %v630
        %v656 = vpack.c.bf16 %v631, %v631
        %v657 = vpack.c.bf16 %v632, %v632
        %v658 = vpack.c.bf16 %v650, %v650
        %v659 = vpack.c.bf16 %v651, %v651
        %v660 = vpack.c.bf16 %v652, %v652
        %v661 = vpack.c.bf16 %v653, %v653
        %v666 = vunpack.c.l.b16 %v654
        %v667 = vunpack.c.l.b16 %v655
        %v668 = vunpack.c.l.b16 %v656
        %v669 = vunpack.c.l.b16 %v657
        %v670 = vpack.c.b16 %v667, %v666
        %v671 = vpack.c.b16 %v669, %v668
        %v678 = vunpack.c.l.b16 %v604
        %v679 = vunpack.c.l.b16 %v605
        %v680 = vunpack.c.l.b16 %v606
        %v681 = vunpack.c.l.b16 %v607
        %v682 = vpack.c.b16 %v679, %v678
        %v683 = vpack.c.b16 %v681, %v680
        %v690 = vunpack.c.l.b16 %v658
        %v691 = vunpack.c.l.b16 %v659
        %v692 = vunpack.c.l.b16 %v660
        %v693 = vunpack.c.l.b16 %v661
        %v694 = vpack.c.b16 %v691, %v690
        %v695 = vpack.c.b16 %v693, %v692
        %v698 = vld [vmem:[%s3] sm:$0xf]
        %v699 = vld [vmem:[%s3 + $0x4] sm:$0xf]
        %v700 = vld [vmem:[%s3 + $0x8] sm:$0xf]
        %v701 = vld [vmem:[%s3 + $0xc] sm:$0xf]
        %v702 = vld [vmem:[%s3 + $0x10] sm:$0xf]
        %v703 = vld [vmem:[%s3 + $0x14] sm:$0xf]
        %v704 = vld [vmem:[%s3 + $0x18] sm:$0xf]
        %v705 = vld [vmem:[%s3 + $0x1c] sm:$0xf]
        %v706 = vld [vmem:[%s3 + $0x20] sm:$0xf]
        %v707 = vld [vmem:[%s3 + $0x24] sm:$0xf]
        %v708 = vld [vmem:[%s3 + $0x28] sm:$0xf]
        %v709 = vld [vmem:[%s3 + $0x2c] sm:$0xf]
        %v710 = vld [vmem:[%s3 + $0x30] sm:$0xf]
        %v711 = vld [vmem:[%s3 + $0x34] sm:$0xf]
        %v712 = vld [vmem:[%s3 + $0x38] sm:$0xf]
        %v713 = vld [vmem:[%s3 + $0x3c] sm:$0xf]
        %v714 = vld [vmem:[%s3 + $0x40] sm:$0xf]
        %v715 = vld [vmem:[%s3 + $0x44] sm:$0xf]
        %v716 = vld [vmem:[%s3 + $0x48] sm:$0xf]
        %v717 = vld [vmem:[%s3 + $0x4c] sm:$0xf]
        %v718 = vld [vmem:[%s3 + $0x50] sm:$0xf]
        %v719 = vld [vmem:[%s3 + $0x54] sm:$0xf]
        %v720 = vld [vmem:[%s3 + $0x58] sm:$0xf]
        %v721 = vld [vmem:[%s3 + $0x5c] sm:$0xf]
        %v722 = vld [vmem:[%s3 + $0x60] sm:$0xf]
        %v723 = vld [vmem:[%s3 + $0x64] sm:$0xf]
        %v724 = vld [vmem:[%s3 + $0x68] sm:$0xf]
        %v725 = vld [vmem:[%s3 + $0x6c] sm:$0xf]
        %v726 = vld [vmem:[%s3 + $0x70] sm:$0xf]
        %v727 = vld [vmem:[%s3 + $0x74] sm:$0xf]
        %v728 = vld [vmem:[%s3 + $0x78] sm:$0xf]
        %v729 = vld [vmem:[%s3 + $0x7c] sm:$0xf]
        %v730 = vld [vmem:[%s3 + $0x80] sm:$0xf]
        %v731 = vld [vmem:[%s3 + $0x84] sm:$0xf]
        %v732 = vld [vmem:[%s3 + $0x88] sm:$0xf]
        %v733 = vld [vmem:[%s3 + $0x8c] sm:$0xf]
        %v734 = vld [vmem:[%s3 + $0x90] sm:$0xf]
        %v735 = vld [vmem:[%s3 + $0x94] sm:$0xf]
        %v736 = vld [vmem:[%s3 + $0x98] sm:$0xf]
        %v737 = vld [vmem:[%s3 + $0x9c] sm:$0xf]
        %v738 = vld [vmem:[%s3 + $0xa0] sm:$0xf]
        %v739 = vld [vmem:[%s3 + $0xa4] sm:$0xf]
        %v740 = vld [vmem:[%s3 + $0xa8] sm:$0xf]
        %v741 = vld [vmem:[%s3 + $0xac] sm:$0xf]
        %v742 = vld [vmem:[%s3 + $0xb0] sm:$0xf]
        %v743 = vld [vmem:[%s3 + $0xb4] sm:$0xf]
        %v744 = vld [vmem:[%s3 + $0xb8] sm:$0xf]
        %v745 = vld [vmem:[%s3 + $0xbc] sm:$0xf]
        %v746 = vld [vmem:[%s4] sm:$0x1]
        %v748 = vperm.slane %v746, 0
        %v798 = vunpack.c.l.b16 %v698
        %v799 = vunpack.c.l.b16 %v699
        %v800 = vunpack.c.l.b16 %v700
        %v801 = vunpack.c.l.b16 %v701
        %v802 = vunpack.c.l.b16 %v702
        %v803 = vunpack.c.l.b16 %v703
        %v804 = vunpack.c.l.b16 %v704
        %v805 = vunpack.c.l.b16 %v705
        %v806 = vunpack.c.l.b16 %v706
        %v807 = vunpack.c.l.b16 %v707
        %v808 = vunpack.c.l.b16 %v708
        %v809 = vunpack.c.l.b16 %v709
        %v810 = vunpack.c.l.b16 %v710
        %v811 = vunpack.c.l.b16 %v711
        %v812 = vunpack.c.l.b16 %v712
        %v813 = vunpack.c.l.b16 %v713
        %v814 = vunpack.c.l.b16 %v714
        %v815 = vunpack.c.l.b16 %v715
        %v816 = vunpack.c.l.b16 %v716
        %v817 = vunpack.c.l.b16 %v717
        %v818 = vunpack.c.l.b16 %v718
        %v819 = vunpack.c.l.b16 %v719
        %v820 = vunpack.c.l.b16 %v720
        %v821 = vunpack.c.l.b16 %v721
        %v822 = vunpack.c.l.b16 %v722
        %v823 = vunpack.c.l.b16 %v723
        %v824 = vunpack.c.l.b16 %v724
        %v825 = vunpack.c.l.b16 %v725
        %v826 = vunpack.c.l.b16 %v726
        %v827 = vunpack.c.l.b16 %v727
        %v828 = vunpack.c.l.b16 %v728
        %v829 = vunpack.c.l.b16 %v729
        %v830 = vunpack.c.l.b16 %v730
        %v831 = vunpack.c.l.b16 %v731
        %v832 = vunpack.c.l.b16 %v732
        %v833 = vunpack.c.l.b16 %v733
        %v834 = vunpack.c.l.b16 %v734
        %v835 = vunpack.c.l.b16 %v735
        %v836 = vunpack.c.l.b16 %v736
        %v837 = vunpack.c.l.b16 %v737
        %v838 = vunpack.c.l.b16 %v738
        %v839 = vunpack.c.l.b16 %v739
        %v840 = vunpack.c.l.b16 %v740
        %v841 = vunpack.c.l.b16 %v741
        %v842 = vunpack.c.l.b16 %v742
        %v843 = vunpack.c.l.b16 %v743
        %v844 = vunpack.c.l.b16 %v744
        %v845 = vunpack.c.l.b16 %v745
        %v846 = vpack.c.b16 %v799, %v798
        %v847 = vpack.c.b16 %v801, %v800
        %v848 = vpack.c.b16 %v803, %v802
        %v849 = vpack.c.b16 %v805, %v804
        %v850 = vpack.c.b16 %v807, %v806
        %v851 = vpack.c.b16 %v809, %v808
        %v852 = vpack.c.b16 %v811, %v810
        %v853 = vpack.c.b16 %v813, %v812
        %v854 = vpack.c.b16 %v815, %v814
        %v855 = vpack.c.b16 %v817, %v816
        %v856 = vpack.c.b16 %v819, %v818
        %v857 = vpack.c.b16 %v821, %v820
        %v858 = vpack.c.b16 %v823, %v822
        %v859 = vpack.c.b16 %v825, %v824
        %v860 = vpack.c.b16 %v827, %v826
        %v861 = vpack.c.b16 %v829, %v828
        %v862 = vpack.c.b16 %v831, %v830
        %v863 = vpack.c.b16 %v833, %v832
        %v864 = vpack.c.b16 %v835, %v834
        %v865 = vpack.c.b16 %v837, %v836
        %v866 = vpack.c.b16 %v839, %v838
        %v867 = vpack.c.b16 %v841, %v840
        %v868 = vpack.c.b16 %v843, %v842
        %v869 = vpack.c.b16 %v845, %v844
        %894 = vmatpush.bf16.msra.mxu0 %v853
        %895 = vmatpush.bf16.msra.mxu0 %v852
        %896 = vmatpush.bf16.msra.mxu0 %v851
        %897 = vmatpush.bf16.msra.mxu0 %v850
        %898 = vmatpush.bf16.msra.mxu0 %v849
        %899 = vmatpush.bf16.msra.mxu0 %v848
        %900 = vmatpush.bf16.msra.mxu0 %v847
        %901 = vmatpush.bf16.msra.mxu0 %v846
        %902 = vmatmul.bf16.gmra.mxu0 %v670
        %v903 = vpop.f32.mrf.mxu0
        %v904 = vadd.f32 %v748, %v903
        %v905 = vpop.f32.mrf.mxu0
        %v906 = vadd.f32 %v748, %v905
        %907 = vmatmul.bf16.gmra.mxu0 %v671
        %v908 = vpop.f32.mrf.mxu0
        %v909 = vadd.f32 %v748, %v908
        %v910 = vpop.f32.mrf.mxu0
        %v911 = vadd.f32 %v748, %v910
        %912 = vdwg.mxu0
        %913 = vmatpush.bf16.msra.mxu0 %v861
        %914 = vmatpush.bf16.msra.mxu0 %v860
        %915 = vmatpush.bf16.msra.mxu0 %v859
        %916 = vmatpush.bf16.msra.mxu0 %v858
        %917 = vmatpush.bf16.msra.mxu0 %v857
        %918 = vmatpush.bf16.msra.mxu0 %v856
        %919 = vmatpush.bf16.msra.mxu0 %v855
        %920 = vmatpush.bf16.msra.mxu0 %v854
        %921 = vmatmul.bf16.gmra.mxu0 %v682
        %v922 = vpop.f32.mrf.mxu0
        %v923 = vadd.f32 %v904, %v922
        %v924 = vpop.f32.mrf.mxu0
        %v925 = vadd.f32 %v906, %v924
        %926 = vmatmul.bf16.gmra.mxu0 %v683
        %v927 = vpop.f32.mrf.mxu0
        %v928 = vadd.f32 %v909, %v927
        %v929 = vpop.f32.mrf.mxu0
        %v930 = vadd.f32 %v911, %v929
        %931 = vdwg.mxu0
        %932 = vmatpush.bf16.msra.mxu0 %v869
        %933 = vmatpush.bf16.msra.mxu0 %v868
        %934 = vmatpush.bf16.msra.mxu0 %v867
        %935 = vmatpush.bf16.msra.mxu0 %v866
        %936 = vmatpush.bf16.msra.mxu0 %v865
        %937 = vmatpush.bf16.msra.mxu0 %v864
        %938 = vmatpush.bf16.msra.mxu0 %v863
        %939 = vmatpush.bf16.msra.mxu0 %v862
        %940 = vmatmul.bf16.gmra.mxu0 %v694
        %v941 = vpop.f32.mrf.mxu0
        %v942 = vadd.f32 %v923, %v941
        %v943 = vpop.f32.mrf.mxu0
        %v944 = vadd.f32 %v925, %v943
        %945 = vmatmul.bf16.gmra.mxu0 %v695
        %v946 = vpop.f32.mrf.mxu0
        %v947 = vadd.f32 %v928, %v946
        %v948 = vpop.f32.mrf.mxu0
        %v949 = vadd.f32 %v930, %v948
        %950 = vdwg.mxu0
        %v951 = vmul.f32 %v942, %v942
        %v952 = vmul.f32 %v944, %v944
        %v953 = vmul.f32 %v947, %v947
        %v954 = vmul.f32 %v949, %v949
        %v955 = vmul.f32 %v942, %v951
        %v956 = vmul.f32 %v944, %v952
        %v957 = vmul.f32 %v947, %v953
        %v958 = vmul.f32 %v949, %v954
        %v959 = vmul.f32 %v955, 0.044715
        %v960 = vmul.f32 %v956, 0.044715
        %v961 = vmul.f32 %v957, 0.044715
        %v962 = vmul.f32 %v958, 0.044715
        %v963 = vadd.f32 %v942, %v959
        %v964 = vadd.f32 %v944, %v960
        %v965 = vadd.f32 %v947, %v961
        %v966 = vadd.f32 %v949, %v962
        %v967 = vmul.f32 %v963, 0.7978846
        %v968 = vmul.f32 %v964, 0.7978846
        %v969 = vmul.f32 %v965, 0.7978846
        %v970 = vmul.f32 %v966, 0.7978846
        %v971 = vtanh.pop %v967
        %v972 = vtanh.pop %v968
        %v973 = vtanh.pop %v969
        %v974 = vtanh.pop %v970
        %v975 = vadd.f32 %v971, 1.0
        %v976 = vadd.f32 %v972, 1.0
        %v977 = vadd.f32 %v973, 1.0
        %v978 = vadd.f32 %v974, 1.0
        %v979 = vmul.f32 %v975, 0.5
        %v980 = vmul.f32 %v976, 0.5
        %v981 = vmul.f32 %v977, 0.5
        %v982 = vmul.f32 %v978, 0.5
        %v983 = vmul.f32 %v942, %v979
        %v984 = vmul.f32 %v944, %v980
        %v985 = vmul.f32 %v947, %v981
        %v986 = vmul.f32 %v949, %v982
        %v987 = vpack.c.bf16 %v983, %v983
        %v988 = vpack.c.bf16 %v984, %v984
        %v989 = vpack.c.bf16 %v985, %v985
        %v990 = vpack.c.bf16 %v986, %v986
        %v991 = vrot.slane %v983, 7
        %v992 = vrot.slane %v984, 7
        %v993 = vrot.slane %v985, 7
        %v994 = vrot.slane %v986, 7
        %v995 = vsel %vm616, %v993, %v994
        %v996 = vsel %vm616, %v992, %v993
        %v997 = vsel %vm616, %v991, %v992
        %v998 = vsel %vm616, %v994, %v991
        %v999 = vsel %vm625, 0.0, %v998
        %v1000 = vsel %vm626, 0.0, %v997
        %v1001 = vsel %vm627, 0.0, %v996
        %v1002 = vsel %vm628, 0.0, %v995
        %v1003 = vrot.slane %v983, 1
        %v1004 = vrot.slane %v984, 1
        %v1005 = vrot.slane %v985, 1
        %v1006 = vrot.slane %v986, 1
        %v1007 = vsel %vm637, %v1005, %v1006
        %v1008 = vsel %vm637, %v1004, %v1005
        %v1009 = vsel %vm637, %v1003, %v1004
        %v1010 = vsel %vm637, %v1006, %v1003
        %v1011 = vsel %vm646, 0.0, %v1009
        %v1012 = vsel %vm647, 0.0, %v1008
        %v1013 = vsel %vm648, 0.0, %v1007
        %v1014 = vsel %vm649, 0.0, %v1010
        %v1015 = vpack.c.bf16 %v999, %v999
        %v1016 = vpack.c.bf16 %v1000, %v1000
        %v1017 = vpack.c.bf16 %v1001, %v1001
        %v1018 = vpack.c.bf16 %v1002, %v1002
        %v1019 = vpack.c.bf16 %v1011, %v1011
        %v1020 = vpack.c.bf16 %v1012, %v1012
        %v1021 = vpack.c.bf16 %v1013, %v1013
        %v1022 = vpack.c.bf16 %v1014, %v1014
        %v1027 = vunpack.c.l.b16 %v1015
        %v1028 = vunpack.c.l.b16 %v1016
        %v1029 = vunpack.c.l.b16 %v1017
        %v1030 = vunpack.c.l.b16 %v1018
        %v1031 = vpack.c.b16 %v1028, %v1027
        %v1032 = vpack.c.b16 %v1030, %v1029
        %v1039 = vunpack.c.l.b16 %v987
        %v1040 = vunpack.c.l.b16 %v988
        %v1041 = vunpack.c.l.b16 %v989
        %v1042 = vunpack.c.l.b16 %v990
        %v1043 = vpack.c.b16 %v1040, %v1039
        %v1044 = vpack.c.b16 %v1042, %v1041
        %v1051 = vunpack.c.l.b16 %v1019
        %v1052 = vunpack.c.l.b16 %v1020
        %v1053 = vunpack.c.l.b16 %v1021
        %v1054 = vunpack.c.l.b16 %v1022
        %v1055 = vpack.c.b16 %v1052, %v1051
        %v1056 = vpack.c.b16 %v1054, %v1053
        %v1059 = vld [vmem:[#allocation2] sm:$0xf]
        %v1060 = vld [vmem:[#allocation2 + $0x4] sm:$0xf]
        %v1061 = vld [vmem:[#allocation2 + $0x8] sm:$0xf]
        %v1062 = vld [vmem:[#allocation2 + $0xc] sm:$0xf]
        %v1063 = vld [vmem:[#allocation2 + $0x10] sm:$0xf]
        %v1064 = vld [vmem:[#allocation2 + $0x14] sm:$0xf]
        %v1065 = vld [vmem:[#allocation2 + $0x18] sm:$0xf]
        %v1066 = vld [vmem:[#allocation2 + $0x1c] sm:$0xf]
        %v1067 = vld [vmem:[#allocation2 + $0x20] sm:$0xf]
        %v1068 = vld [vmem:[#allocation2 + $0x24] sm:$0xf]
        %v1069 = vld [vmem:[#allocation2 + $0x28] sm:$0xf]
        %v1070 = vld [vmem:[#allocation2 + $0x2c] sm:$0xf]
        %v1071 = vld [vmem:[#allocation2 + $0x30] sm:$0xf]
        %v1072 = vld [vmem:[#allocation2 + $0x34] sm:$0xf]
        %v1073 = vld [vmem:[#allocation2 + $0x38] sm:$0xf]
        %v1074 = vld [vmem:[#allocation2 + $0x3c] sm:$0xf]
        %v1075 = vld [vmem:[#allocation2 + $0x40] sm:$0xf]
        %v1076 = vld [vmem:[#allocation2 + $0x44] sm:$0xf]
        %v1077 = vld [vmem:[#allocation2 + $0x48] sm:$0xf]
        %v1078 = vld [vmem:[#allocation2 + $0x4c] sm:$0xf]
        %v1079 = vld [vmem:[#allocation2 + $0x50] sm:$0xf]
        %v1080 = vld [vmem:[#allocation2 + $0x54] sm:$0xf]
        %v1081 = vld [vmem:[#allocation2 + $0x58] sm:$0xf]
        %v1082 = vld [vmem:[#allocation2 + $0x5c] sm:$0xf]
        %v1083 = vld [vmem:[#allocation2 + $0x60] sm:$0xf]
        %v1084 = vld [vmem:[#allocation2 + $0x64] sm:$0xf]
        %v1085 = vld [vmem:[#allocation2 + $0x68] sm:$0xf]
        %v1086 = vld [vmem:[#allocation2 + $0x6c] sm:$0xf]
        %v1087 = vld [vmem:[#allocation2 + $0x70] sm:$0xf]
        %v1088 = vld [vmem:[#allocation2 + $0x74] sm:$0xf]
        %v1089 = vld [vmem:[#allocation2 + $0x78] sm:$0xf]
        %v1090 = vld [vmem:[#allocation2 + $0x7c] sm:$0xf]
        %v1091 = vld [vmem:[#allocation2 + $0x80] sm:$0xf]
        %v1092 = vld [vmem:[#allocation2 + $0x84] sm:$0xf]
        %v1093 = vld [vmem:[#allocation2 + $0x88] sm:$0xf]
        %v1094 = vld [vmem:[#allocation2 + $0x8c] sm:$0xf]
        %v1095 = vld [vmem:[#allocation2 + $0x90] sm:$0xf]
        %v1096 = vld [vmem:[#allocation2 + $0x94] sm:$0xf]
        %v1097 = vld [vmem:[#allocation2 + $0x98] sm:$0xf]
        %v1098 = vld [vmem:[#allocation2 + $0x9c] sm:$0xf]
        %v1099 = vld [vmem:[#allocation2 + $0xa0] sm:$0xf]
        %v1100 = vld [vmem:[#allocation2 + $0xa4] sm:$0xf]
        %v1101 = vld [vmem:[#allocation2 + $0xa8] sm:$0xf]
        %v1102 = vld [vmem:[#allocation2 + $0xac] sm:$0xf]
        %v1103 = vld [vmem:[#allocation2 + $0xb0] sm:$0xf]
        %v1104 = vld [vmem:[#allocation2 + $0xb4] sm:$0xf]
        %v1105 = vld [vmem:[#allocation2 + $0xb8] sm:$0xf]
        %v1106 = vld [vmem:[#allocation2 + $0xbc] sm:$0xf]
        %v1107 = vld [vmem:[%s6] sm:$0x1]
        %v1109 = vperm.slane %v1107, 0
        %v1159 = vunpack.c.l.b16 %v1059
        %v1160 = vunpack.c.l.b16 %v1060
        %v1161 = vunpack.c.l.b16 %v1061
        %v1162 = vunpack.c.l.b16 %v1062
        %v1163 = vunpack.c.l.b16 %v1063
        %v1164 = vunpack.c.l.b16 %v1064
        %v1165 = vunpack.c.l.b16 %v1065
        %v1166 = vunpack.c.l.b16 %v1066
        %v1167 = vunpack.c.l.b16 %v1067
        %v1168 = vunpack.c.l.b16 %v1068
        %v1169 = vunpack.c.l.b16 %v1069
        %v1170 = vunpack.c.l.b16 %v1070
        %v1171 = vunpack.c.l.b16 %v1071
        %v1172 = vunpack.c.l.b16 %v1072
        %v1173 = vunpack.c.l.b16 %v1073
        %v1174 = vunpack.c.l.b16 %v1074
        %v1175 = vunpack.c.l.b16 %v1075
        %v1176 = vunpack.c.l.b16 %v1076
        %v1177 = vunpack.c.l.b16 %v1077
        %v1178 = vunpack.c.l.b16 %v1078
        %v1179 = vunpack.c.l.b16 %v1079
        %v1180 = vunpack.c.l.b16 %v1080
        %v1181 = vunpack.c.l.b16 %v1081
        %v1182 = vunpack.c.l.b16 %v1082
        %v1183 = vunpack.c.l.b16 %v1083
        %v1184 = vunpack.c.l.b16 %v1084
        %v1185 = vunpack.c.l.b16 %v1085
        %v1186 = vunpack.c.l.b16 %v1086
        %v1187 = vunpack.c.l.b16 %v1087
        %v1188 = vunpack.c.l.b16 %v1088
        %v1189 = vunpack.c.l.b16 %v1089
        %v1190 = vunpack.c.l.b16 %v1090
        %v1191 = vunpack.c.l.b16 %v1091
        %v1192 = vunpack.c.l.b16 %v1092
        %v1193 = vunpack.c.l.b16 %v1093
        %v1194 = vunpack.c.l.b16 %v1094
        %v1195 = vunpack.c.l.b16 %v1095
        %v1196 = vunpack.c.l.b16 %v1096
        %v1197 = vunpack.c.l.b16 %v1097
        %v1198 = vunpack.c.l.b16 %v1098
        %v1199 = vunpack.c.l.b16 %v1099
        %v1200 = vunpack.c.l.b16 %v1100
        %v1201 = vunpack.c.l.b16 %v1101
        %v1202 = vunpack.c.l.b16 %v1102
        %v1203 = vunpack.c.l.b16 %v1103
        %v1204 = vunpack.c.l.b16 %v1104
        %v1205 = vunpack.c.l.b16 %v1105
        %v1206 = vunpack.c.l.b16 %v1106
        %v1207 = vpack.c.b16 %v1160, %v1159
        %v1208 = vpack.c.b16 %v1162, %v1161
        %v1209 = vpack.c.b16 %v1164, %v1163
        %v1210 = vpack.c.b16 %v1166, %v1165
        %v1211 = vpack.c.b16 %v1168, %v1167
        %v1212 = vpack.c.b16 %v1170, %v1169
        %v1213 = vpack.c.b16 %v1172, %v1171
        %v1214 = vpack.c.b16 %v1174, %v1173
        %v1215 = vpack.c.b16 %v1176, %v1175
        %v1216 = vpack.c.b16 %v1178, %v1177
        %v1217 = vpack.c.b16 %v1180, %v1179
        %v1218 = vpack.c.b16 %v1182, %v1181
        %v1219 = vpack.c.b16 %v1184, %v1183
        %v1220 = vpack.c.b16 %v1186, %v1185
        %v1221 = vpack.c.b16 %v1188, %v1187
        %v1222 = vpack.c.b16 %v1190, %v1189
        %v1223 = vpack.c.b16 %v1192, %v1191
        %v1224 = vpack.c.b16 %v1194, %v1193
        %v1225 = vpack.c.b16 %v1196, %v1195
        %v1226 = vpack.c.b16 %v1198, %v1197
        %v1227 = vpack.c.b16 %v1200, %v1199
        %v1228 = vpack.c.b16 %v1202, %v1201
        %v1229 = vpack.c.b16 %v1204, %v1203
        %v1230 = vpack.c.b16 %v1206, %v1205
        %1255 = vmatpush.bf16.msra.mxu0 %v1214
        %1256 = vmatpush.bf16.msra.mxu0 %v1213
        %1257 = vmatpush.bf16.msra.mxu0 %v1212
        %1258 = vmatpush.bf16.msra.mxu0 %v1211
        %1259 = vmatpush.bf16.msra.mxu0 %v1210
        %1260 = vmatpush.bf16.msra.mxu0 %v1209
        %1261 = vmatpush.bf16.msra.mxu0 %v1208
        %1262 = vmatpush.bf16.msra.mxu0 %v1207
        %1263 = vmatmul.bf16.gmra.mxu0 %v1031
        %v1264 = vpop.f32.mrf.mxu0
        %v1265 = vadd.f32 %v1109, %v1264
        %v1266 = vpop.f32.mrf.mxu0
        %v1267 = vadd.f32 %v1109, %v1266
        %1268 = vmatmul.bf16.gmra.mxu0 %v1032
        %v1269 = vpop.f32.mrf.mxu0
        %v1270 = vadd.f32 %v1109, %v1269
        %v1271 = vpop.f32.mrf.mxu0
        %v1272 = vadd.f32 %v1109, %v1271
        %1273 = vdwg.mxu0
        %1274 = vmatpush.bf16.msra.mxu0 %v1222
        %1275 = vmatpush.bf16.msra.mxu0 %v1221
        %1276 = vmatpush.bf16.msra.mxu0 %v1220
        %1277 = vmatpush.bf16.msra.mxu0 %v1219
        %1278 = vmatpush.bf16.msra.mxu0 %v1218
        %1279 = vmatpush.bf16.msra.mxu0 %v1217
        %1280 = vmatpush.bf16.msra.mxu0 %v1216
        %1281 = vmatpush.bf16.msra.mxu0 %v1215
        %1282 = vmatmul.bf16.gmra.mxu0 %v1043
        %v1283 = vpop.f32.mrf.mxu0
        %v1284 = vadd.f32 %v1265, %v1283
        %v1285 = vpop.f32.mrf.mxu0
        %v1286 = vadd.f32 %v1267, %v1285
        %1287 = vmatmul.bf16.gmra.mxu0 %v1044
        %v1288 = vpop.f32.mrf.mxu0
        %v1289 = vadd.f32 %v1270, %v1288
        %v1290 = vpop.f32.mrf.mxu0
        %v1291 = vadd.f32 %v1272, %v1290
        %1292 = vdwg.mxu0
        %1293 = vmatpush.bf16.msra.mxu0 %v1230
        %1294 = vmatpush.bf16.msra.mxu0 %v1229
        %1295 = vmatpush.bf16.msra.mxu0 %v1228
        %1296 = vmatpush.bf16.msra.mxu0 %v1227
        %1297 = vmatpush.bf16.msra.mxu0 %v1226
        %1298 = vmatpush.bf16.msra.mxu0 %v1225
        %1299 = vmatpush.bf16.msra.mxu0 %v1224
        %1300 = vmatpush.bf16.msra.mxu0 %v1223
        %1301 = vmatmul.bf16.gmra.mxu0 %v1055
        %v1302 = vpop.f32.mrf.mxu0
        %v1303 = vadd.f32 %v1284, %v1302
        %v1304 = vpop.f32.mrf.mxu0
        %v1305 = vadd.f32 %v1286, %v1304
        %1306 = vmatmul.bf16.gmra.mxu0 %v1056
        %v1307 = vpop.f32.mrf.mxu0
        %v1308 = vadd.f32 %v1289, %v1307
        %v1309 = vpop.f32.mrf.mxu0
        %v1310 = vadd.f32 %v1291, %v1309
        %1311 = vdwg.mxu0
        %v1312 = vmul.f32 %v1303, %v1303
        %v1313 = vmul.f32 %v1305, %v1305
        %v1314 = vmul.f32 %v1308, %v1308
        %v1315 = vmul.f32 %v1310, %v1310
        %v1316 = vmul.f32 %v1303, %v1312
        %v1317 = vmul.f32 %v1305, %v1313
        %v1318 = vmul.f32 %v1308, %v1314
        %v1319 = vmul.f32 %v1310, %v1315
        %v1320 = vmul.f32 %v1316, 0.044715
        %v1321 = vmul.f32 %v1317, 0.044715
        %v1322 = vmul.f32 %v1318, 0.044715
        %v1323 = vmul.f32 %v1319, 0.044715
        %v1324 = vadd.f32 %v1303, %v1320
        %v1325 = vadd.f32 %v1305, %v1321
        %v1326 = vadd.f32 %v1308, %v1322
        %v1327 = vadd.f32 %v1310, %v1323
        %v1328 = vmul.f32 %v1324, 0.7978846
        %v1329 = vmul.f32 %v1325, 0.7978846
        %v1330 = vmul.f32 %v1326, 0.7978846
        %v1331 = vmul.f32 %v1327, 0.7978846
        %v1332 = vtanh.pop %v1328
        %v1333 = vtanh.pop %v1329
        %v1334 = vtanh.pop %v1330
        %v1335 = vtanh.pop %v1331
        %v1336 = vadd.f32 %v1332, 1.0
        %v1337 = vadd.f32 %v1333, 1.0
        %v1338 = vadd.f32 %v1334, 1.0
        %v1339 = vadd.f32 %v1335, 1.0
        %v1340 = vmul.f32 %v1336, 0.5
        %v1341 = vmul.f32 %v1337, 0.5
        %v1342 = vmul.f32 %v1338, 0.5
        %v1343 = vmul.f32 %v1339, 0.5
        %v1344 = vmul.f32 %v1303, %v1340
        %v1345 = vmul.f32 %v1305, %v1341
        %v1346 = vmul.f32 %v1308, %v1342
        %v1347 = vmul.f32 %v1310, %v1343
        %v1348 = vld [vmem:[%s2] sm:$0xff]
        %v1349 = vld [vmem:[%s2 + $0x8] sm:$0xff]
        %v1350 = vld [vmem:[%s2 + $0x10] sm:$0xff]
        %v1351 = vld [vmem:[%s2 + $0x18] sm:$0xff]
        %v1352 = vadd.f32 %v1344, %v1348
        %v1353 = vadd.f32 %v1345, %v1349
        %v1354 = vadd.f32 %v1346, %v1350
        %v1355 = vadd.f32 %v1347, %v1351
        %1356 = vadd.xlane.f32.xlu0 %v1352
        %v1357 = vpop.xlane.xlu0 %1356
        %1358 = vadd.xlane.f32.xlu0 %v1353
        %v1359 = vpop.xlane.xlu0 %1358
        %1360 = vadd.xlane.f32.xlu0 %v1354
        %v1361 = vpop.xlane.xlu0 %1360
        %1362 = vadd.xlane.f32.xlu0 %v1355
        %v1363 = vpop.xlane.xlu0 %1362
        %v1364 = vmul.f32 %v1357, 0.03125
        %v1365 = vmul.f32 %v1359, 0.03125
        %v1366 = vmul.f32 %v1361, 0.03125
        %v1367 = vmul.f32 %v1363, 0.03125
        %v1368 = vmul.f32 %v1352, %v1352
        %v1369 = vmul.f32 %v1353, %v1353
        %v1370 = vmul.f32 %v1354, %v1354
        %v1371 = vmul.f32 %v1355, %v1355
        %1372 = vadd.xlane.f32.xlu0 %v1368
        %v1373 = vpop.xlane.xlu0 %1372
        %1374 = vadd.xlane.f32.xlu0 %v1369
        %v1375 = vpop.xlane.xlu0 %1374
        %1376 = vadd.xlane.f32.xlu0 %v1370
        %v1377 = vpop.xlane.xlu0 %1376
        %1378 = vadd.xlane.f32.xlu0 %v1371
        %v1379 = vpop.xlane.xlu0 %1378
        %v1380 = vmul.f32 %v1373, 0.03125
        %v1381 = vmul.f32 %v1375, 0.03125
        %v1382 = vmul.f32 %v1377, 0.03125
        %v1383 = vmul.f32 %v1379, 0.03125
        %v1384 = vmul.f32 %v1364, %v1364
        %v1385 = vmul.f32 %v1365, %v1365
        %v1386 = vmul.f32 %v1366, %v1366
        %v1387 = vmul.f32 %v1367, %v1367
        %v1388 = vsub.f32 %v1380, %v1384
        %v1389 = vsub.f32 %v1381, %v1385
        %v1390 = vsub.f32 %v1382, %v1386
        %v1391 = vsub.f32 %v1383, %v1387
        %v1392 = vsub.f32 %v1352, %v1364
        %v1393 = vsub.f32 %v1353, %v1365
        %v1394 = vsub.f32 %v1354, %v1366
        %v1395 = vsub.f32 %v1355, %v1367
        %v1396 = vadd.f32 %v1388, 1e-05
        %v1397 = vadd.f32 %v1389, 1e-05
        %v1398 = vadd.f32 %v1390, 1e-05
        %v1399 = vadd.f32 %v1391, 1e-05
        %v1400 = vrsqrt.pop %v1396
        %v1401 = vmul.f32 %v1400, %v1396
        %v1402 = vmul.f32 %v1401, %v1400
        %v1403 = vmul.f32 0.5, %v1402
        %v1404 = vsub.f32 1.5, %v1403
        %v1405 = vmul.f32 %v1400, %v1404
        %vm1406 = vweird.f32 %v1396
        %vm1407 = vweird.f32 %v1400
        %vm1408 = vmor %vm1406, %vm1407
        %v1409 = vsel %vm1408, %v1400, %v1405
        %v1410 = vrsqrt.pop %v1397
        %v1411 = vmul.f32 %v1410, %v1397
        %v1412 = vmul.f32 %v1411, %v1410
        %v1413 = vmul.f32 0.5, %v1412
        %v1414 = vsub.f32 1.5, %v1413
        %v1415 = vmul.f32 %v1410, %v1414
        %vm1416 = vweird.f32 %v1397
        %vm1417 = vweird.f32 %v1410
        %vm1418 = vmor %vm1416, %vm1417
        %v1419 = vsel %vm1418, %v1410, %v1415
        %v1420 = vrsqrt.pop %v1398
        %v1421 = vmul.f32 %v1420, %v1398
        %v1422 = vmul.f32 %v1421, %v1420
        %v1423 = vmul.f32 0.5, %v1422
        %v1424 = vsub.f32 1.5, %v1423
        %v1425 = vmul.f32 %v1420, %v1424
        %vm1426 = vweird.f32 %v1398
        %vm1427 = vweird.f32 %v1420
        %vm1428 = vmor %vm1426, %vm1427
        %v1429 = vsel %vm1428, %v1420, %v1425
        %v1430 = vrsqrt.pop %v1399
        %v1431 = vmul.f32 %v1430, %v1399
        %v1432 = vmul.f32 %v1431, %v1430
        %v1433 = vmul.f32 0.5, %v1432
        %v1434 = vsub.f32 1.5, %v1433
        %v1435 = vmul.f32 %v1430, %v1434
        %vm1436 = vweird.f32 %v1399
        %vm1437 = vweird.f32 %v1430
        %vm1438 = vmor %vm1436, %vm1437
        %v1439 = vsel %vm1438, %v1430, %v1435
        %v1440 = vmul.f32 %v1392, %v1409
        %v1441 = vmul.f32 %v1393, %v1419
        %v1442 = vmul.f32 %v1394, %v1429
        %v1443 = vmul.f32 %v1395, %v1439
        %v1444 = vld [vmem:[%s7] sm:$0x1]
        %v1446 = vperm.slane %v1444, 0
        %v1448 = vmul.f32 %v1440, %v1446
        %v1449 = vmul.f32 %v1441, %v1446
        %v1450 = vmul.f32 %v1442, %v1446
        %v1451 = vmul.f32 %v1443, %v1446
        %v1452 = vld [vmem:[%s8] sm:$0x1]
        %v1454 = vperm.slane %v1452, 0
        %v1456 = vadd.f32 %v1448, %v1454
        %v1457 = vadd.f32 %v1449, %v1454
        %v1458 = vadd.f32 %v1450, %v1454
        %v1459 = vadd.f32 %v1451, %v1454
        %v1460 = vld [vmem:[%s535] sm:$0xff]
        %v1461 = vld [vmem:[%s535 + $0x8] sm:$0xff]
        %v1462 = vld [vmem:[%s535 + $0x10] sm:$0xff]
        %v1463 = vld [vmem:[%s535 + $0x18] sm:$0xff]
        %v1464 = vld [vmem:[%s9] sm:$0x1]
        %1466 = vset.pattern.permute.xlu0 0
        %1467 = vperm.xlu0 %1466, %v1460
        %v1468 = vpop.permute.xlu0 %1467
        %1471 = vset.pattern.permute.xlu0 0
        %1472 = vperm.xlu0 %1471, %v1461
        %v1473 = vpop.permute.xlu0 %1472
        %1476 = vset.pattern.permute.xlu0 0
        %1477 = vperm.xlu0 %1476, %v1462
        %v1478 = vpop.permute.xlu0 %1477
        %1481 = vset.pattern.permute.xlu0 0
        %1482 = vperm.xlu0 %1481, %v1463
        %v1483 = vpop.permute.xlu0 %1482
        %v1486 = vperm.slane %v1464, 0
        %v1488 = vmul.f32 %v1468, %v1486
        %v1489 = vmul.f32 %v1473, %v1486
        %v1490 = vmul.f32 %v1478, %v1486
        %v1491 = vmul.f32 %v1483, %v1486
        %v1492 = vadd.f32 %v1456, %v1488
        %v1493 = vadd.f32 %v1457, %v1489
        %v1494 = vadd.f32 %v1458, %v1490
        %v1495 = vadd.f32 %v1459, %v1491
        %v1496 = vpack.c.bf16 %v1493, %v1492
        %v1497 = vpack.c.bf16 %v1495, %v1494
        %v1498 = vld [vmem:[#allocation4] sm:$0xf]
        %v1499 = vld [vmem:[#allocation4 + $0x4] sm:$0xf]
        %v1500 = vld [vmem:[#allocation4 + $0x8] sm:$0xf]
        %v1501 = vld [vmem:[#allocation4 + $0xc] sm:$0xf]
        %v1502 = vld [vmem:[#allocation4 + $0x10] sm:$0xf]
        %v1503 = vld [vmem:[#allocation4 + $0x14] sm:$0xf]
        %v1504 = vld [vmem:[#allocation4 + $0x18] sm:$0xf]
        %v1505 = vld [vmem:[#allocation4 + $0x1c] sm:$0xf]
        %v1506 = vld [vmem:[#allocation4 + $0x20] sm:$0xf]
        %v1507 = vld [vmem:[#allocation4 + $0x24] sm:$0xf]
        %v1508 = vld [vmem:[#allocation4 + $0x28] sm:$0xf]
        %v1509 = vld [vmem:[#allocation4 + $0x2c] sm:$0xf]
        %v1510 = vld [vmem:[#allocation4 + $0x30] sm:$0xf]
        %v1511 = vld [vmem:[#allocation4 + $0x34] sm:$0xf]
        %v1512 = vld [vmem:[#allocation4 + $0x38] sm:$0xf]
        %v1513 = vld [vmem:[#allocation4 + $0x3c] sm:$0xf]
        %v1514 = vld [vmem:[%s11] sm:$0x1]
        %v1516 = vperm.slane %v1514, 0
        %v1534 = vunpack.c.l.b16 %v1498
        %v1535 = vunpack.c.l.b16 %v1499
        %v1536 = vunpack.c.l.b16 %v1500
        %v1537 = vunpack.c.l.b16 %v1501
        %v1538 = vunpack.c.l.b16 %v1502
        %v1539 = vunpack.c.l.b16 %v1503
        %v1540 = vunpack.c.l.b16 %v1504
        %v1541 = vunpack.c.l.b16 %v1505
        %v1542 = vunpack.c.l.b16 %v1506
        %v1543 = vunpack.c.l.b16 %v1507
        %v1544 = vunpack.c.l.b16 %v1508
        %v1545 = vunpack.c.l.b16 %v1509
        %v1546 = vunpack.c.l.b16 %v1510
        %v1547 = vunpack.c.l.b16 %v1511
        %v1548 = vunpack.c.l.b16 %v1512
        %v1549 = vunpack.c.l.b16 %v1513
        %v1550 = vpack.c.b16 %v1535, %v1534
        %v1551 = vpack.c.b16 %v1537, %v1536
        %v1552 = vpack.c.b16 %v1539, %v1538
        %v1553 = vpack.c.b16 %v1541, %v1540
        %v1554 = vpack.c.b16 %v1543, %v1542
        %v1555 = vpack.c.b16 %v1545, %v1544
        %v1556 = vpack.c.b16 %v1547, %v1546
        %v1557 = vpack.c.b16 %v1549, %v1548
        %1566 = vmatpush.bf16.msra.mxu0 %v1557
        %1567 = vmatpush.bf16.msra.mxu0 %v1556
        %1568 = vmatpush.bf16.msra.mxu0 %v1555
        %1569 = vmatpush.bf16.msra.mxu0 %v1554
        %1570 = vmatpush.bf16.msra.mxu0 %v1553
        %1571 = vmatpush.bf16.msra.mxu0 %v1552
        %1572 = vmatpush.bf16.msra.mxu0 %v1551
        %1573 = vmatpush.bf16.msra.mxu0 %v1550
        %1574 = vmatmul.bf16.gmra.mxu0 %v1496
        %v1575 = vpop.f32.mrf.mxu0
        %v1576 = vadd.f32 %v1516, %v1575
        %v1577 = vpop.f32.mrf.mxu0
        %v1578 = vadd.f32 %v1516, %v1577
        %1579 = vmatmul.bf16.gmra.mxu0 %v1497
        %v1580 = vpop.f32.mrf.mxu0
        %v1581 = vadd.f32 %v1516, %v1580
        %v1582 = vpop.f32.mrf.mxu0
        %v1583 = vadd.f32 %v1516, %v1582
        %1584 = vdwg.mxu0
        %v1585 = vmul.f32 %v1576, %v1576
        %v1586 = vmul.f32 %v1578, %v1578
        %v1587 = vmul.f32 %v1581, %v1581
        %v1588 = vmul.f32 %v1583, %v1583
        %v1589 = vmul.f32 %v1576, %v1585
        %v1590 = vmul.f32 %v1578, %v1586
        %v1591 = vmul.f32 %v1581, %v1587
        %v1592 = vmul.f32 %v1583, %v1588
        %v1593 = vmul.f32 %v1589, 0.044715
        %v1594 = vmul.f32 %v1590, 0.044715
        %v1595 = vmul.f32 %v1591, 0.044715
        %v1596 = vmul.f32 %v1592, 0.044715
        %v1597 = vadd.f32 %v1576, %v1593
        %v1598 = vadd.f32 %v1578, %v1594
        %v1599 = vadd.f32 %v1581, %v1595
        %v1600 = vadd.f32 %v1583, %v1596
        %v1601 = vmul.f32 %v1597, 0.7978846
        %v1602 = vmul.f32 %v1598, 0.7978846
        %v1603 = vmul.f32 %v1599, 0.7978846
        %v1604 = vmul.f32 %v1600, 0.7978846
        %v1605 = vtanh.pop %v1601
        %v1606 = vtanh.pop %v1602
        %v1607 = vtanh.pop %v1603
        %v1608 = vtanh.pop %v1604
        %v1609 = vadd.f32 %v1605, 1.0
        %v1610 = vadd.f32 %v1606, 1.0
        %v1611 = vadd.f32 %v1607, 1.0
        %v1612 = vadd.f32 %v1608, 1.0
        %v1613 = vmul.f32 %v1609, 0.5
        %v1614 = vmul.f32 %v1610, 0.5
        %v1615 = vmul.f32 %v1611, 0.5
        %v1616 = vmul.f32 %v1612, 0.5
        %v1617 = vmul.f32 %v1576, %v1613
        %v1618 = vmul.f32 %v1578, %v1614
        %v1619 = vmul.f32 %v1581, %v1615
        %v1620 = vmul.f32 %v1583, %v1616
        %v1621 = vpack.c.bf16 %v1618, %v1617
        %v1622 = vpack.c.bf16 %v1620, %v1619
        %v1623 = vld [vmem:[#allocation6] sm:$0xf]
        %v1624 = vld [vmem:[#allocation6 + $0x4] sm:$0xf]
        %v1625 = vld [vmem:[#allocation6 + $0x8] sm:$0xf]
        %v1626 = vld [vmem:[#allocation6 + $0xc] sm:$0xf]
        %v1627 = vld [vmem:[#allocation6 + $0x10] sm:$0xf]
        %v1628 = vld [vmem:[#allocation6 + $0x14] sm:$0xf]
        %v1629 = vld [vmem:[#allocation6 + $0x18] sm:$0xf]
        %v1630 = vld [vmem:[#allocation6 + $0x1c] sm:$0xf]
        %v1631 = vld [vmem:[#allocation6 + $0x20] sm:$0xf]
        %v1632 = vld [vmem:[#allocation6 + $0x24] sm:$0xf]
        %v1633 = vld [vmem:[#allocation6 + $0x28] sm:$0xf]
        %v1634 = vld [vmem:[#allocation6 + $0x2c] sm:$0xf]
        %v1635 = vld [vmem:[#allocation6 + $0x30] sm:$0xf]
        %v1636 = vld [vmem:[#allocation6 + $0x34] sm:$0xf]
        %v1637 = vld [vmem:[#allocation6 + $0x38] sm:$0xf]
        %v1638 = vld [vmem:[#allocation6 + $0x3c] sm:$0xf]
        %v1639 = vld [vmem:[%s13] sm:$0x1]
        %v1641 = vperm.slane %v1639, 0
        %v1659 = vunpack.c.l.b16 %v1623
        %v1660 = vunpack.c.l.b16 %v1624
        %v1661 = vunpack.c.l.b16 %v1625
        %v1662 = vunpack.c.l.b16 %v1626
        %v1663 = vunpack.c.l.b16 %v1627
        %v1664 = vunpack.c.l.b16 %v1628
        %v1665 = vunpack.c.l.b16 %v1629
        %v1666 = vunpack.c.l.b16 %v1630
        %v1667 = vunpack.c.l.b16 %v1631
        %v1668 = vunpack.c.l.b16 %v1632
        %v1669 = vunpack.c.l.b16 %v1633
        %v1670 = vunpack.c.l.b16 %v1634
        %v1671 = vunpack.c.l.b16 %v1635
        %v1672 = vunpack.c.l.b16 %v1636
        %v1673 = vunpack.c.l.b16 %v1637
        %v1674 = vunpack.c.l.b16 %v1638
        %v1675 = vpack.c.b16 %v1660, %v1659
        %v1676 = vpack.c.b16 %v1662, %v1661
        %v1677 = vpack.c.b16 %v1664, %v1663
        %v1678 = vpack.c.b16 %v1666, %v1665
        %v1679 = vpack.c.b16 %v1668, %v1667
        %v1680 = vpack.c.b16 %v1670, %v1669
        %v1681 = vpack.c.b16 %v1672, %v1671
        %v1682 = vpack.c.b16 %v1674, %v1673
        %1691 = vmatpush.bf16.msra.mxu0 %v1682
        %1692 = vmatpush.bf16.msra.mxu0 %v1681
        %1693 = vmatpush.bf16.msra.mxu0 %v1680
        %1694 = vmatpush.bf16.msra.mxu0 %v1679
        %1695 = vmatpush.bf16.msra.mxu0 %v1678
        %1696 = vmatpush.bf16.msra.mxu0 %v1677
        %1697 = vmatpush.bf16.msra.mxu0 %v1676
        %1698 = vmatpush.bf16.msra.mxu0 %v1675
        %1699 = vmatmul.bf16.gmra.mxu0 %v1621
        %v1700 = vpop.f32.mrf.mxu0
        %v1701 = vadd.f32 %v1641, %v1700
        %v1702 = vpop.f32.mrf.mxu0
        %v1703 = vadd.f32 %v1641, %v1702
        %1704 = vmatmul.bf16.gmra.mxu0 %v1622
        %v1705 = vpop.f32.mrf.mxu0
        %v1706 = vadd.f32 %v1641, %v1705
        %v1707 = vpop.f32.mrf.mxu0
        %v1708 = vadd.f32 %v1641, %v1707
        %1709 = vdwg.mxu0
        %1710 = vst [vmem:[%s541] sm:$0xff] %v1701
        %1711 = vst [vmem:[%s541 + $0x8] sm:$0xff] %v1703
        %1712 = vst [vmem:[%s541 + $0x10] sm:$0xff] %v1706
        %1713 = vst [vmem:[%s541 + $0x18] sm:$0xff] %v1708
        %s1714 = smul.u32 4, %s27
        %p1715 = scmp.lt.s32.totalorder %s1714, 7
        %s1716 = scalar_select %p1715, %s1714, 7
        %s1717 = smul.addr %s1716, 8
        %s1718 = scalar_lea.vmem %s14, %s1717
        // Predicated region
        $region89: #{mae_forward.1} parent=75 // pred_check
          %p1719 = pneg %p349
        $region90: #{mae_forward.1} parent=75 // pred_check_branch
          %1721 = sbr.rel (%p1719) target = $region92
        $region91: #{mae_forward.1} parent=75 // pred_region
          %s1722 = smul.u32 4, %s27
        $region92: #{mae_forward.1} parent=75 // pred_fallthru
          _
      $region76: #{mae_forward.1} parent=5 // pred_fallthru
        _
      %p1723 = scmp.le.s32.totalorder 2, %s22
      // Predicated region
      $region93: #{mae_forward.1} parent=5 // pred_check
        %p1724 = pneg %p1723
      $region94: #{mae_forward.1} parent=5 // pred_check_branch
        %1726 = sbr.rel (%p1724) target = $region96
      $region95: #{mae_forward.1} parent=5 // pred_region
        %s1727 = ssub.s32 %s22, 2
        // Predicated region
        $region97: #{mae_forward.1} parent=95 // pred_check
          %p1728 = pneg %p355
        $region98: #{mae_forward.1} parent=95 // pred_check_branch
          %1730 = sbr.rel (%p1728) target = $region100
        $region99: #{mae_forward.1} parent=95 // pred_region
          %s1731 = smul.u32 4, %s28
          %p1732 = scmp.lt.s32.totalorder %s1731, 7
          %s1733 = scalar_select %p1732, %s1731, 7
          %s1734 = smul.addr %s1733, 8
          %s1735 = scalar_lea.vmem %s14, %s1734
        $region100: #{mae_forward.1} parent=95 // pred_fallthru
          _
      $region96: #{mae_forward.1} parent=5 // pred_fallthru
        _
    $region6: #{mae_forward.1} parent=1 // loop_footer
      %s26 = sadd.s32 1, %s22
    $region7: #{mae_forward.1} parent=1 // loop_footer_branch
      %21 = sbr.rel target = $region3
    $region8: #{mae_forward.1} parent=1 // loop_exit
      _
    %1736 = vsyncpa [#allocation3], 1
    %s1737 = scalar_lea.sflag [#allocation3], 1
    %1738 = vsyncpa %s1737, 1
    %1739 = vsyncpa [#allocation5], 1

</llo_original>
